<compile_context>
chip_gen: v5e
topology: v5e:2x2
jax: 0.10.0
libtpu: 0.0.40
codegen_flags: <defaults>
</compile_context>

<pallas_src>
import functools

import numpy as np
import jax
import jax.numpy as jnp
from jax import lax
from jax.experimental import pallas as pl
from jax.experimental.pallas import tpu as pltpu

LANE_TILE = 512            # lane-axis tile width (sweep 256/512/1024)
NEG_INF = float("-inf")


def _round_up(a, b):
    return -(-a // b) * b


def _log_tsallis15_kernel(x_ref, o_ref, *, d_real):
    # x_ref, o_ref: (D, TN) float32 tiles; each column is an independent problem.
    X = x_ref[...]
    D, TN = X.shape

    # 1) Tsallis-1.5 preprocessing: subtract per-column max, divide by 2.
    mx = jnp.max(X, axis=0, keepdims=True)
    Xs = (X - mx) * 0.5

    # 2) Descending rank of each element within its column (ties broken by index).
    #    Iotas are lane-independent (D, D, 1); no 3-D int32 tensors materialised.
    Xj = Xs[:, None, :]                                     # value at index j -> axis 0
    Xi = Xs[None, :, :]                                     # value at index i -> axis 1
    jj = lax.broadcasted_iota(jnp.int32, (D, D, 1), 0)
    ii = lax.broadcasted_iota(jnp.int32, (D, D, 1), 1)
    tie = jnp.where(jj < ii, 1, 0)                          # (D, D, 1) int32
    beats = jnp.where(Xj > Xi, 1, jnp.where(Xj == Xi, tie, 0))   # (D, D, TN)
    rank = jnp.sum(beats, axis=0)                           # (D, TN) int32, 0-based

    # 3) Sorted (descending) values via one indicator pass; prefix sums on the MXU.
    pos_k = lax.broadcasted_iota(jnp.int32, (1, D, 1), 1)   # sorted position k
    eq = rank[:, None, :] == pos_k                          # (D, D, TN)
    Xsrt = jnp.sum(jnp.where(eq, Xj, 0.0), axis=0)          # (D, TN) sorted values

    pos = lax.broadcasted_iota(jnp.int32, (D, 1), 0)        # (D, 1) position index
    if d_real < D:
        # Padded rows hold -inf; zero them so the matmul never sees 0 * inf.
        Xsrt_mm = jnp.where(pos < d_real, Xsrt, 0.0)
    else:
        Xsrt_mm = Xsrt

    kk = lax.broadcasted_iota(jnp.int32, (D, D), 0)
    ii2 = lax.broadcasted_iota(jnp.int32, (D, D), 1)
    tri = (ii2 <= kk).astype(jnp.float32)                   # lower-triangular ones
    S1 = jnp.dot(tri, Xsrt_mm, preferred_element_type=jnp.float32,
                 precision=lax.Precision.HIGHEST)           # cumsum of sorted values
    S2 = jnp.dot(tri, Xsrt_mm * Xsrt_mm, preferred_element_type=jnp.float32,
                 precision=lax.Precision.HIGHEST)           # cumsum of sorted squares

    # 4) Tsallis-1.5 threshold tau* and support size.
    rho = (pos + 1).astype(jnp.float32)                     # (D, 1)
    inv_rho = 1.0 / rho                                     # exact, tiny divide once
    mean = S1 * inv_rho
    mean_sq = S2 * inv_rho
    ss = rho * (mean_sq - mean * mean)
    delta_nz = jnp.maximum((1.0 - ss) * inv_rho, 0.0)
    tau = mean - jnp.sqrt(delta_nz)

    support = jnp.sum(jnp.where(tau <= Xsrt, 1, 0), axis=0, keepdims=True)   # (1, TN)
    tau_star = jnp.sum(jnp.where(pos == support - 1, tau, 0.0),
                       axis=0, keepdims=True)                                # (1, TN)

    # 5) Y = relu(Xs - tau*)^2 ; output log(Y)  (zeros -> -inf, same as torch).
    Y = jnp.maximum(Xs - tau_star, 0.0)
    o_ref[...] = jnp.log(Y * Y)


def log_tsallis15_topk(x, dim=0, k=100):
    """Exact forward of LogTsallis15TopK(dim, k).  `k` only affects the torch-side
    optimization path, not the mathematical result, so it is unused here."""
    del k
    x = jnp.asarray(x, jnp.float32)
    xm = jnp.moveaxis(x, dim, 0)
    d_real = xm.shape[0]
    rest = xm.shape[1:]
    n = int(np.prod(rest)) if rest else 1
    x2 = xm.reshape(d_real, n)

    # Pad the Tsallis dim to a multiple of 8 sublanes with -inf so padded rows rank
    # last and never enter the support.
    d_pad = _round_up(d_real, 8)
    if d_pad != d_real:
        x2 = jnp.pad(x2, ((0, d_pad - d_real), (0, 0)), constant_values=NEG_INF)

    # Wide lane tiles amortise per-step overhead; don't over-pad tiny inputs.
    lane_tile = min(LANE_TILE, _round_up(n, 128))
    n_pad = _round_up(n, lane_tile)
    if n_pad != n:
        x2 = jnp.pad(x2, ((0, 0), (0, n_pad - n)))

    kernel = functools.partial(_log_tsallis15_kernel, d_real=d_real)
    out = pl.pallas_call(
        kernel,
        out_shape=jax.ShapeDtypeStruct((d_pad, n_pad), jnp.float32),
        grid_spec=pltpu.PrefetchScalarGridSpec(
            num_scalar_prefetch=0,
            grid=(n_pad // lane_tile,),
            in_specs=[pl.BlockSpec((d_pad, lane_tile), lambda j: (0, j))],
            out_specs=pl.BlockSpec((d_pad, lane_tile), lambda j: (0, j)),
        ),
        compiler_params=pltpu.CompilerParams(
            dimension_semantics=("parallel",),
            vmem_limit_bytes=32 * 1024 * 1024,   # above v5e's 16 MiB default
        ),
    )(x2)

    out = out[:d_real, :n].reshape((d_real,) + rest)
    return jnp.moveaxis(out, 0, dim)


def _reference_log_tsallis15(x, dim=0):
    """Pure-JAX reference mirroring the torch code (full-sort path)."""
    xm = jnp.moveaxis(jnp.asarray(x, jnp.float32), dim, 0)
    mx = jnp.max(xm, axis=0, keepdims=True)
    xs = (xm - mx) / 2.0
    xsrt = -jnp.sort(-xs, axis=0)
    D = xs.shape[0]
    rho = jnp.arange(1, D + 1, dtype=jnp.float32).reshape((D,) + (1,) * (xs.ndim - 1))
    mean = jnp.cumsum(xsrt, axis=0) / rho
    mean_sq = jnp.cumsum(xsrt ** 2, axis=0) / rho
    ss = rho * (mean_sq - mean ** 2)
    delta_nz = jnp.clip((1.0 - ss) / rho, 0.0)
    tau = mean - jnp.sqrt(delta_nz)
    support = jnp.sum(tau <= xsrt, axis=0, keepdims=True)
    tau_star = jnp.take_along_axis(tau, support - 1, axis=0)
    y = jnp.clip(xs - tau_star, 0.0) ** 2
    return jnp.moveaxis(jnp.log(y), 0, dim)


if __name__ == "__main__":
    key = jax.random.PRNGKey(0)
    k1, k2 = jax.random.split(key)

    # Case 1: module defaults (dim=0, k=100); Tsallis dim D=32 first, small batch.
    x1 = jax.random.normal(k1, (32, 2, 8), dtype=jnp.float32)
    out1 = jax.block_until_ready(log_tsallis15_topk(x1, dim=0, k=100))
    ref1 = _reference_log_tsallis15(x1, dim=0)
    # Compare in probability space (exp) so -inf (zero-probability) entries match.
    np.testing.assert_allclose(np.exp(np.asarray(out1)), np.exp(np.asarray(ref1)),
                               atol=1e-5, rtol=1e-4)

    # Case 2: exercises -inf row padding (D=20), lane padding and a 2-step grid.
    x2 = jax.random.normal(k2, (4, 20, 200), dtype=jnp.float32)
    out2 = jax.block_until_ready(log_tsallis15_topk(x2, dim=1, k=100))
    ref2 = _reference_log_tsallis15(x2, dim=1)
    np.testing.assert_allclose(np.exp(np.asarray(out2)), np.exp(np.asarray(ref2)),
                               atol=1e-5, rtol=1e-4)

    print("KERNEL_OK")
</pallas_src>

<mosaic_0001>
module attributes {stable_mosaic.version = 11 : i64} {
  func.func @_log_tsallis15_kernel(%arg0: i32, %arg1: memref<32x128xf32, #tpu.memory_space<vmem>>, %arg2: memref<32x128xf32, #tpu.memory_space<vmem>>) attributes {dimension_semantics = [#tpu.dimension_semantics<parallel>], iteration_bounds = array<i64: 1>, scalar_prefetch = 0 : i64, scratch_operands = 0 : i64, tpu.core_type = #tpu.core_type<tc>, window_params = [{transform_indices = @transform_0, window_bounds = array<i64: 32, 128>}, {transform_indices = @transform_1, window_bounds = array<i64: 32, 128>}]} {
    %c0 = arith.constant 0 : index
    %c0_0 = arith.constant 0 : index
    %0 = vector.load %arg1[%c0, %c0_0] : memref<32x128xf32, #tpu.memory_space<vmem>>, vector<32x128xf32>
    %cst = arith.constant dense<0xFF800000> : vector<128xf32>
    %1 = vector.multi_reduction <maximumf>, %0, %cst [0] : vector<32x128xf32> to vector<128xf32>
    %2 = vector.shape_cast %1 : vector<128xf32> to vector<1x128xf32>
    %3 = vector.broadcast %2 : vector<1x128xf32> to vector<32x128xf32>
    %4 = arith.subf %0, %3 : vector<32x128xf32>
    %cst_1 = arith.constant 5.000000e-01 : f32
    %5 = vector.broadcast %cst_1 : f32 to vector<32x128xf32>
    %6 = arith.mulf %4, %5 : vector<32x128xf32>
    %7 = vector.shape_cast %6 : vector<32x128xf32> to vector<32x1x128xf32>
    %8 = vector.shape_cast %6 : vector<32x128xf32> to vector<1x32x128xf32>
    %9 = tpu.iota {dimensions = array<i32: 0>} : vector<32x32x1xi32>
    %10 = tpu.iota {dimensions = array<i32: 1>} : vector<32x32x1xi32>
    %11 = arith.cmpi slt, %9, %10 : vector<32x32x1xi32>
    %c1_i32 = arith.constant 1 : i32
    %c0_i32 = arith.constant 0 : i32
    %12 = vector.broadcast %c1_i32 : i32 to vector<32x32x1xi32>
    %13 = vector.broadcast %c0_i32 : i32 to vector<32x32x1xi32>
    %14 = arith.select %11, %12, %13 : vector<32x32x1xi1>, vector<32x32x1xi32>
    %15 = vector.broadcast %7 : vector<32x1x128xf32> to vector<32x32x128xf32>
    %16 = vector.broadcast %8 : vector<1x32x128xf32> to vector<32x32x128xf32>
    %17 = arith.cmpf ogt, %15, %16 : vector<32x32x128xf32>
    %18 = vector.broadcast %7 : vector<32x1x128xf32> to vector<32x32x128xf32>
    %19 = vector.broadcast %8 : vector<1x32x128xf32> to vector<32x32x128xf32>
    %20 = arith.cmpf oeq, %18, %19 : vector<32x32x128xf32>
    %c0_i32_2 = arith.constant 0 : i32
    %21 = vector.shape_cast %14 : vector<32x32x1xi32> to vector<32x32x1xi32>
    %22 = vector.broadcast %21 : vector<32x32x1xi32> to vector<32x32x128xi32>
    %23 = vector.broadcast %c0_i32_2 : i32 to vector<32x32x128xi32>
    %24 = arith.select %20, %22, %23 : vector<32x32x128xi1>, vector<32x32x128xi32>
    %c1_i32_3 = arith.constant 1 : i32
    %25 = vector.broadcast %c1_i32_3 : i32 to vector<32x32x128xi32>
    %26 = arith.select %17, %25, %24 : vector<32x32x128xi1>, vector<32x32x128xi32>
    %cst_4 = arith.constant dense<0> : vector<32x128xi32>
    %27 = vector.multi_reduction <add>, %26, %cst_4 [0] : vector<32x32x128xi32> to vector<32x128xi32>
    %28 = tpu.iota {dimensions = array<i32: 1>} : vector<1x32x1xi32>
    %29 = vector.shape_cast %27 : vector<32x128xi32> to vector<32x1x128xi32>
    %30 = vector.broadcast %29 : vector<32x1x128xi32> to vector<32x32x128xi32>
    %31 = vector.broadcast %28 : vector<1x32x1xi32> to vector<32x32x128xi32>
    %32 = arith.cmpi eq, %30, %31 : vector<32x32x128xi32>
    %cst_5 = arith.constant 0.000000e+00 : f32
    %33 = vector.shape_cast %7 : vector<32x1x128xf32> to vector<32x1x128xf32>
    %34 = vector.broadcast %33 : vector<32x1x128xf32> to vector<32x32x128xf32>
    %35 = vector.broadcast %cst_5 : f32 to vector<32x32x128xf32>
    %36 = arith.select %32, %34, %35 : vector<32x32x128xi1>, vector<32x32x128xf32>
    %cst_6 = arith.constant dense<0.000000e+00> : vector<32x128xf32>
    %37 = vector.multi_reduction <add>, %36, %cst_6 [0] : vector<32x32x128xf32> to vector<32x128xf32>
    %38 = tpu.iota {dimensions = array<i32: 0>} : vector<32x1xi32>
    %39 = tpu.iota {dimensions = array<i32: 0>} : vector<32x32xi32>
    %40 = tpu.iota {dimensions = array<i32: 1>} : vector<32x32xi32>
    %41 = arith.cmpi sle, %40, %39 : vector<32x32xi32>
    %42 = arith.extui %41 : vector<32x32xi1> to vector<32x32xi32>
    %43 = arith.sitofp %42 : vector<32x32xi32> to vector<32x32xf32>
    %cst_7 = arith.constant dense<0.000000e+00> : vector<32x128xf32>
    %44 = tpu.matmul %43, %37, %cst_7 {dimension_numbers = #tpu.dot_dimension_numbers<[1], [0], [0], [1], [0, 0, 1, 1], [], []>, precision = #tpu.contract_precision<fp32>} : vector<32x32xf32>, vector<32x128xf32>, vector<32x128xf32> -> vector<32x128xf32>
    %45 = arith.mulf %37, %37 : vector<32x128xf32>
    %cst_8 = arith.constant dense<0.000000e+00> : vector<32x128xf32>
    %46 = tpu.matmul %43, %45, %cst_8 {dimension_numbers = #tpu.dot_dimension_numbers<[1], [0], [0], [1], [0, 0, 1, 1], [], []>, precision = #tpu.contract_precision<fp32>} : vector<32x32xf32>, vector<32x128xf32>, vector<32x128xf32> -> vector<32x128xf32>
    %c1_i32_9 = arith.constant 1 : i32
    %47 = vector.broadcast %c1_i32_9 : i32 to vector<32x1xi32>
    %48 = arith.addi %38, %47 : vector<32x1xi32>
    %49 = arith.sitofp %48 : vector<32x1xi32> to vector<32x1xf32>
    %cst_10 = arith.constant 1.000000e+00 : f32
    %50 = vector.broadcast %cst_10 : f32 to vector<32x1xf32>
    %51 = arith.divf %50, %49 : vector<32x1xf32>
    %52 = vector.broadcast %51 : vector<32x1xf32> to vector<32x128xf32>
    %53 = arith.mulf %44, %52 : vector<32x128xf32>
    %54 = vector.broadcast %51 : vector<32x1xf32> to vector<32x128xf32>
    %55 = arith.mulf %46, %54 : vector<32x128xf32>
    %56 = arith.mulf %53, %53 : vector<32x128xf32>
    %57 = arith.subf %55, %56 : vector<32x128xf32>
    %58 = vector.broadcast %49 : vector<32x1xf32> to vector<32x128xf32>
    %59 = arith.mulf %58, %57 : vector<32x128xf32>
    %cst_11 = arith.constant 1.000000e+00 : f32
    %60 = vector.broadcast %cst_11 : f32 to vector<32x128xf32>
    %61 = arith.subf %60, %59 : vector<32x128xf32>
    %62 = vector.broadcast %51 : vector<32x1xf32> to vector<32x128xf32>
    %63 = arith.mulf %61, %62 : vector<32x128xf32>
    %cst_12 = arith.constant 0.000000e+00 : f32
    %64 = vector.broadcast %cst_12 : f32 to vector<32x128xf32>
    %65 = arith.maximumf %63, %64 : vector<32x128xf32>
    %66 = math.sqrt %65 : vector<32x128xf32>
    %67 = arith.subf %53, %66 : vector<32x128xf32>
    %68 = arith.cmpf ole, %67, %37 : vector<32x128xf32>
    %c1_i32_13 = arith.constant 1 : i32
    %c0_i32_14 = arith.constant 0 : i32
    %69 = vector.broadcast %c1_i32_13 : i32 to vector<32x128xi32>
    %70 = vector.broadcast %c0_i32_14 : i32 to vector<32x128xi32>
    %71 = arith.select %68, %69, %70 : vector<32x128xi1>, vector<32x128xi32>
    %cst_15 = arith.constant dense<0> : vector<128xi32>
    %72 = vector.multi_reduction <add>, %71, %cst_15 [0] : vector<32x128xi32> to vector<128xi32>
    %73 = vector.shape_cast %72 : vector<128xi32> to vector<1x128xi32>
    %c1_i32_16 = arith.constant 1 : i32
    %74 = vector.broadcast %c1_i32_16 : i32 to vector<1x128xi32>
    %75 = arith.subi %73, %74 : vector<1x128xi32>
    %76 = vector.broadcast %38 : vector<32x1xi32> to vector<32x128xi32>
    %77 = vector.broadcast %75 : vector<1x128xi32> to vector<32x128xi32>
    %78 = arith.cmpi eq, %76, %77 : vector<32x128xi32>
    %cst_17 = arith.constant 0.000000e+00 : f32
    %79 = vector.broadcast %cst_17 : f32 to vector<32x128xf32>
    %80 = arith.select %78, %67, %79 : vector<32x128xi1>, vector<32x128xf32>
    %cst_18 = arith.constant dense<0.000000e+00> : vector<128xf32>
    %81 = vector.multi_reduction <add>, %80, %cst_18 [0] : vector<32x128xf32> to vector<128xf32>
    %82 = vector.shape_cast %81 : vector<128xf32> to vector<1x128xf32>
    %83 = vector.broadcast %82 : vector<1x128xf32> to vector<32x128xf32>
    %84 = arith.subf %6, %83 : vector<32x128xf32>
    %cst_19 = arith.constant 0.000000e+00 : f32
    %85 = vector.broadcast %cst_19 : f32 to vector<32x128xf32>
    %86 = arith.maximumf %84, %85 : vector<32x128xf32>
    %87 = arith.mulf %86, %86 : vector<32x128xf32>
    %88 = math.log %87 : vector<32x128xf32>
    %c0_20 = arith.constant 0 : index
    %c0_21 = arith.constant 0 : index
    %89 = vector.load %arg2[%c0_20, %c0_21] : memref<32x128xf32, #tpu.memory_space<vmem>>, vector<32x128xf32>
    tpu.vector_store %arg2[%c0_20, %c0_21], %88 {strides = array<i32>} : memref<32x128xf32, #tpu.memory_space<vmem>>, vector<32x128xf32>,
    return
  }
  func.func @transform_0(%arg0: i32) -> (i32, i32) {
    %c0_i32 = arith.constant 0 : i32
    %c0_i32_0 = arith.constant 0 : i32
    return %c0_i32, %arg0 : i32, i32
  }
  func.func @transform_1(%arg0: i32) -> (i32, i32) {
    %c0_i32 = arith.constant 0 : i32
    %c0_i32_0 = arith.constant 0 : i32
    return %c0_i32, %arg0 : i32, i32
  }
}

</mosaic_0001>

<llo_original>
// kernel: tpu_custom_call.1
$region0: #{tpu_custom_call.1}
  #allocation0 [shape = 'u32[]', space=smem, size = 0x4, offset = 0x4, fixed_abs, tag = 'smem constant byte address 0x4 - core index']
  #allocation1 [shape = 'u32[72,128]{1,0:T(1,128)}', space=vmem, size = 0x9000, scoped, tag = 'internal scratch']
  %s0 = inlined_call_operand.hbm [shape: f32[32,128], index: 0, kind: input, shape index: {}]
  %s1 = inlined_call_operand.hbm [shape: f32[32,128], index: 1, kind: output, shape index: {}]
  %s2 = sld [smem:[#allocation0]]
  $region18: #{tpu_custom_call.1} parent=0
    _
  %s4 = ssub.s32 1, %s2
  %s5 = scalar_select 0, %s4, %s2
  $region1: #{tpu_custom_call.1} parent=0
    #allocation2 [shape = 'u8[16384]{0}', space=vmem, size = 0x4000, scoped, tag = 'input window, operand 0, single buffered']
    #allocation3 [shape = 's32[1]{0}', space=sflag, size = 0x4, scoped, tag = 'scoped memory for tpu_custom_call.1']
    #allocation4 [shape = 's32[1]{0}', space=sflag, size = 0x4, scoped, tag = 'scoped memory for tpu_custom_call.1']
    #allocation5 [shape = 'u8[16384]{0}', space=vmem, size = 0x4000, scoped, tag = 'output window, operand 0, single buffered']
    %6 = vsyncpa [#allocation3], 0
    %7 = vsyncpa [#allocation4], 0
    // Predicated region
    $region2: #{tpu_custom_call.1} parent=1 // pred_check
      _
    $region3: #{tpu_custom_call.1} parent=1 // pred_check_branch
      %9 = sbr.rel (0) target = $region5
    $region4: #{tpu_custom_call.1} parent=1 // pred_region
      %11 = vsyncadd [#allocation3], 0
      %s12 = sshll.u32 %s0, 4
      %s13 = int_to_ptr.hbm [resolvable:$true] %s12
      %s14 = sshll.u32 [#allocation2], 4
      %s15 = int_to_ptr.vmem [resolvable:$true] %s14
      %20 = dma.hbm_to_vmem [thread:$0]  %s13, 512, %s15, [#allocation3], 128, 128, 8
    $region5: #{tpu_custom_call.1} parent=1 // pred_fallthru
      _
    // Predicated region
    $region6: #{tpu_custom_call.1} parent=1 // pred_check
      _
    $region7: #{tpu_custom_call.1} parent=1 // pred_check_branch
      %22 = sbr.rel (0) target = $region9
    $region8: #{tpu_custom_call.1} parent=1 // pred_region
      %24 = dma.done [#allocation3], 512
    $region9: #{tpu_custom_call.1} parent=1 // pred_fallthru
      _
    %v25 = vld [vmem:[#allocation2] sm:$0xff]
    %v26 = vld [vmem:[#allocation2 + $0x8] sm:$0xff]
    %v27 = vld [vmem:[#allocation2 + $0x10] sm:$0xff]
    %v28 = vld [vmem:[#allocation2 + $0x18] sm:$0xff]
    %v29 = vmax.f32 %v25, %v26
    %v30 = vmax.f32 %v27, %v28
    %v31 = vmax.f32 %v29, %v30
    %v32 = vrot.slane %v31, 4
    %v33 = vmax.f32 %v31, %v32
    %v34 = vrot.slane %v33, 2
    %v35 = vmax.f32 %v33, %v34
    %v36 = vrot.slane %v35, 1
    %v37 = vmax.f32 %v35, %v36
    %v38 = vsub.f32 %v25, %v37
    %v39 = vsub.f32 %v26, %v37
    %v40 = vsub.f32 %v27, %v37
    %v41 = vsub.f32 %v28, %v37
    %v42 = vmul.f32 %v38, 0.5
    %v43 = vmul.f32 %v39, 0.5
    %v44 = vmul.f32 %v40, 0.5
    %v45 = vmul.f32 %v41, 0.5
    %v50 = vrot.slane %v42, 1
    %v51 = vrot.slane %v42, 2
    %v52 = vrot.slane %v42, 3
    %v53 = vrot.slane %v42, 4
    %v54 = vrot.slane %v42, 5
    %v55 = vrot.slane %v42, 6
    %v56 = vrot.slane %v42, 7
    %v57 = vrot.slane %v43, 1
    %v58 = vrot.slane %v43, 2
    %v59 = vrot.slane %v43, 3
    %v60 = vrot.slane %v43, 4
    %v61 = vrot.slane %v43, 5
    %v62 = vrot.slane %v43, 6
    %v63 = vrot.slane %v43, 7
    %v64 = vrot.slane %v44, 1
    %v65 = vrot.slane %v44, 2
    %v66 = vrot.slane %v44, 3
    %v67 = vrot.slane %v44, 4
    %v68 = vrot.slane %v44, 5
    %v69 = vrot.slane %v44, 6
    %v70 = vrot.slane %v44, 7
    %v71 = vrot.slane %v45, 1
    %v72 = vrot.slane %v45, 2
    %v73 = vrot.slane %v45, 3
    %v74 = vrot.slane %v45, 4
    %v75 = vrot.slane %v45, 5
    %v76 = vrot.slane %v45, 6
    %v77 = vrot.slane %v45, 7
    %v78 = vlaneseq
    %v79 = vshrl.u32 %v78, 7
    %v80 = vadd.s32 %v79, 8
    %v81 = vadd.s32 %v79, 16
    %v82 = vadd.s32 %v79, 24
    %vm83 = vcmp.gt.s32.totalorder %v79, 0
    %vm84 = vcmp.gt.s32.totalorder %v80, 0
    %vm85 = vcmp.gt.s32.totalorder %v81, 0
    %vm86 = vcmp.gt.s32.totalorder %v82, 0
    %vm87 = vcmp.gt.s32.totalorder %v79, 1
    %vm88 = vcmp.gt.s32.totalorder %v80, 1
    %vm89 = vcmp.gt.s32.totalorder %v81, 1
    %vm90 = vcmp.gt.s32.totalorder %v82, 1
    %vm91 = vcmp.gt.s32.totalorder %v79, 2
    %vm92 = vcmp.gt.s32.totalorder %v80, 2
    %vm93 = vcmp.gt.s32.totalorder %v81, 2
    %vm94 = vcmp.gt.s32.totalorder %v82, 2
    %vm95 = vcmp.gt.s32.totalorder %v79, 3
    %vm96 = vcmp.gt.s32.totalorder %v80, 3
    %vm97 = vcmp.gt.s32.totalorder %v81, 3
    %vm98 = vcmp.gt.s32.totalorder %v82, 3
    %vm99 = vcmp.gt.s32.totalorder %v79, 4
    %vm100 = vcmp.gt.s32.totalorder %v80, 4
    %vm101 = vcmp.gt.s32.totalorder %v81, 4
    %vm102 = vcmp.gt.s32.totalorder %v82, 4
    %vm103 = vcmp.gt.s32.totalorder %v79, 5
    %vm104 = vcmp.gt.s32.totalorder %v80, 5
    %vm105 = vcmp.gt.s32.totalorder %v81, 5
    %vm106 = vcmp.gt.s32.totalorder %v82, 5
    %vm107 = vcmp.gt.s32.totalorder %v79, 6
    %vm108 = vcmp.gt.s32.totalorder %v80, 6
    %vm109 = vcmp.gt.s32.totalorder %v81, 6
    %vm110 = vcmp.gt.s32.totalorder %v82, 6
    %vm111 = vcmp.gt.s32.totalorder %v79, 7
    %vm112 = vcmp.gt.s32.totalorder %v80, 7
    %vm113 = vcmp.gt.s32.totalorder %v81, 7
    %vm114 = vcmp.gt.s32.totalorder %v82, 7
    %vm115 = vcmp.gt.s32.totalorder %v79, 8
    %vm116 = vcmp.gt.s32.totalorder %v80, 8
    %vm117 = vcmp.gt.s32.totalorder %v81, 8
    %vm118 = vcmp.gt.s32.totalorder %v82, 8
    %vm119 = vcmp.gt.s32.totalorder %v79, 9
    %vm120 = vcmp.gt.s32.totalorder %v80, 9
    %vm121 = vcmp.gt.s32.totalorder %v81, 9
    %vm122 = vcmp.gt.s32.totalorder %v82, 9
    %vm123 = vcmp.gt.s32.totalorder %v79, 10
    %vm124 = vcmp.gt.s32.totalorder %v80, 10
    %vm125 = vcmp.gt.s32.totalorder %v81, 10
    %vm126 = vcmp.gt.s32.totalorder %v82, 10
    %vm127 = vcmp.gt.s32.totalorder %v79, 11
    %vm128 = vcmp.gt.s32.totalorder %v80, 11
    %vm129 = vcmp.gt.s32.totalorder %v81, 11
    %vm130 = vcmp.gt.s32.totalorder %v82, 11
    %vm131 = vcmp.gt.s32.totalorder %v79, 12
    %vm132 = vcmp.gt.s32.totalorder %v80, 12
    %vm133 = vcmp.gt.s32.totalorder %v81, 12
    %vm134 = vcmp.gt.s32.totalorder %v82, 12
    %vm135 = vcmp.gt.s32.totalorder %v79, 13
    %vm136 = vcmp.gt.s32.totalorder %v80, 13
    %vm137 = vcmp.gt.s32.totalorder %v81, 13
    %vm138 = vcmp.gt.s32.totalorder %v82, 13
    %vm139 = vcmp.gt.s32.totalorder %v79, 14
    %vm140 = vcmp.gt.s32.totalorder %v80, 14
    %vm141 = vcmp.gt.s32.totalorder %v81, 14
    %vm142 = vcmp.gt.s32.totalorder %v82, 14
    %vm143 = vcmp.gt.s32.totalorder %v79, 15
    %vm144 = vcmp.gt.s32.totalorder %v80, 15
    %vm145 = vcmp.gt.s32.totalorder %v81, 15
    %vm146 = vcmp.gt.s32.totalorder %v82, 15
    %vm147 = vcmp.gt.s32.totalorder %v79, 16
    %vm148 = vcmp.gt.s32.totalorder %v80, 16
    %vm149 = vcmp.gt.s32.totalorder %v81, 16
    %vm150 = vcmp.gt.s32.totalorder %v82, 16
    %vm151 = vcmp.gt.s32.totalorder %v79, 17
    %vm152 = vcmp.gt.s32.totalorder %v80, 17
    %vm153 = vcmp.gt.s32.totalorder %v81, 17
    %vm154 = vcmp.gt.s32.totalorder %v82, 17
    %vm155 = vcmp.gt.s32.totalorder %v79, 18
    %vm156 = vcmp.gt.s32.totalorder %v80, 18
    %vm157 = vcmp.gt.s32.totalorder %v81, 18
    %vm158 = vcmp.gt.s32.totalorder %v82, 18
    %vm159 = vcmp.gt.s32.totalorder %v79, 19
    %vm160 = vcmp.gt.s32.totalorder %v80, 19
    %vm161 = vcmp.gt.s32.totalorder %v81, 19
    %vm162 = vcmp.gt.s32.totalorder %v82, 19
    %vm163 = vcmp.gt.s32.totalorder %v79, 20
    %vm164 = vcmp.gt.s32.totalorder %v80, 20
    %vm165 = vcmp.gt.s32.totalorder %v81, 20
    %vm166 = vcmp.gt.s32.totalorder %v82, 20
    %vm167 = vcmp.gt.s32.totalorder %v79, 21
    %vm168 = vcmp.gt.s32.totalorder %v80, 21
    %vm169 = vcmp.gt.s32.totalorder %v81, 21
    %vm170 = vcmp.gt.s32.totalorder %v82, 21
    %vm171 = vcmp.gt.s32.totalorder %v79, 22
    %vm172 = vcmp.gt.s32.totalorder %v80, 22
    %vm173 = vcmp.gt.s32.totalorder %v81, 22
    %vm174 = vcmp.gt.s32.totalorder %v82, 22
    %vm175 = vcmp.gt.s32.totalorder %v79, 23
    %vm176 = vcmp.gt.s32.totalorder %v80, 23
    %vm177 = vcmp.gt.s32.totalorder %v81, 23
    %vm178 = vcmp.gt.s32.totalorder %v82, 23
    %vm179 = vcmp.gt.s32.totalorder %v79, 24
    %vm180 = vcmp.gt.s32.totalorder %v80, 24
    %vm181 = vcmp.gt.s32.totalorder %v81, 24
    %vm182 = vcmp.gt.s32.totalorder %v82, 24
    %vm183 = vcmp.gt.s32.totalorder %v79, 25
    %vm184 = vcmp.gt.s32.totalorder %v80, 25
    %vm185 = vcmp.gt.s32.totalorder %v81, 25
    %vm186 = vcmp.gt.s32.totalorder %v82, 25
    %vm187 = vcmp.gt.s32.totalorder %v79, 26
    %vm188 = vcmp.gt.s32.totalorder %v80, 26
    %vm189 = vcmp.gt.s32.totalorder %v81, 26
    %vm190 = vcmp.gt.s32.totalorder %v82, 26
    %vm191 = vcmp.gt.s32.totalorder %v79, 27
    %vm192 = vcmp.gt.s32.totalorder %v80, 27
    %vm193 = vcmp.gt.s32.totalorder %v81, 27
    %vm194 = vcmp.gt.s32.totalorder %v82, 27
    %vm195 = vcmp.gt.s32.totalorder %v79, 28
    %vm196 = vcmp.gt.s32.totalorder %v80, 28
    %vm197 = vcmp.gt.s32.totalorder %v81, 28
    %vm198 = vcmp.gt.s32.totalorder %v82, 28
    %vm199 = vcmp.gt.s32.totalorder %v79, 29
    %vm200 = vcmp.gt.s32.totalorder %v80, 29
    %vm201 = vcmp.gt.s32.totalorder %v81, 29
    %vm202 = vcmp.gt.s32.totalorder %v82, 29
    %vm203 = vcmp.gt.s32.totalorder %v79, 30
    %vm204 = vcmp.gt.s32.totalorder %v80, 30
    %vm205 = vcmp.gt.s32.totalorder %v81, 30
    %vm206 = vcmp.gt.s32.totalorder %v82, 30
    %vm207 = vcmp.gt.s32.totalorder %v79, 31
    %vm208 = vcmp.gt.s32.totalorder %v80, 31
    %vm209 = vcmp.gt.s32.totalorder %v81, 31
    %vm210 = vcmp.gt.s32.totalorder %v82, 31
    %v211 = vsel %vm83, 1, 0
    %v212 = vsel %vm84, 1, 0
    %v213 = vsel %vm85, 1, 0
    %v214 = vsel %vm86, 1, 0
    %v215 = vsel %vm87, 1, 0
    %v216 = vsel %vm88, 1, 0
    %v217 = vsel %vm89, 1, 0
    %v218 = vsel %vm90, 1, 0
    %v219 = vsel %vm91, 1, 0
    %v220 = vsel %vm92, 1, 0
    %v221 = vsel %vm93, 1, 0
    %v222 = vsel %vm94, 1, 0
    %v223 = vsel %vm95, 1, 0
    %v224 = vsel %vm96, 1, 0
    %v225 = vsel %vm97, 1, 0
    %v226 = vsel %vm98, 1, 0
    %v227 = vsel %vm99, 1, 0
    %v228 = vsel %vm100, 1, 0
    %v229 = vsel %vm101, 1, 0
    %v230 = vsel %vm102, 1, 0
    %v231 = vsel %vm103, 1, 0
    %v232 = vsel %vm104, 1, 0
    %v233 = vsel %vm105, 1, 0
    %v234 = vsel %vm106, 1, 0
    %v235 = vsel %vm107, 1, 0
    %v236 = vsel %vm108, 1, 0
    %v237 = vsel %vm109, 1, 0
    %v238 = vsel %vm110, 1, 0
    %v239 = vsel %vm111, 1, 0
    %v240 = vsel %vm112, 1, 0
    %v241 = vsel %vm113, 1, 0
    %v242 = vsel %vm114, 1, 0
    %v243 = vsel %vm115, 1, 0
    %v244 = vsel %vm116, 1, 0
    %v245 = vsel %vm117, 1, 0
    %v246 = vsel %vm118, 1, 0
    %v247 = vsel %vm119, 1, 0
    %v248 = vsel %vm120, 1, 0
    %v249 = vsel %vm121, 1, 0
    %v250 = vsel %vm122, 1, 0
    %v251 = vsel %vm123, 1, 0
    %v252 = vsel %vm124, 1, 0
    %v253 = vsel %vm125, 1, 0
    %v254 = vsel %vm126, 1, 0
    %v255 = vsel %vm127, 1, 0
    %v256 = vsel %vm128, 1, 0
    %v257 = vsel %vm129, 1, 0
    %v258 = vsel %vm130, 1, 0
    %v259 = vsel %vm131, 1, 0
    %v260 = vsel %vm132, 1, 0
    %v261 = vsel %vm133, 1, 0
    %v262 = vsel %vm134, 1, 0
    %v263 = vsel %vm135, 1, 0
    %v264 = vsel %vm136, 1, 0
    %v265 = vsel %vm137, 1, 0
    %v266 = vsel %vm138, 1, 0
    %v267 = vsel %vm139, 1, 0
    %v268 = vsel %vm140, 1, 0
    %v269 = vsel %vm141, 1, 0
    %v270 = vsel %vm142, 1, 0
    %v271 = vsel %vm143, 1, 0
    %v272 = vsel %vm144, 1, 0
    %v273 = vsel %vm145, 1, 0
    %v274 = vsel %vm146, 1, 0
    %v275 = vsel %vm147, 1, 0
    %v276 = vsel %vm148, 1, 0
    %v277 = vsel %vm149, 1, 0
    %v278 = vsel %vm150, 1, 0
    %v279 = vsel %vm151, 1, 0
    %v280 = vsel %vm152, 1, 0
    %v281 = vsel %vm153, 1, 0
    %v282 = vsel %vm154, 1, 0
    %v283 = vsel %vm155, 1, 0
    %v284 = vsel %vm156, 1, 0
    %v285 = vsel %vm157, 1, 0
    %v286 = vsel %vm158, 1, 0
    %v287 = vsel %vm159, 1, 0
    %v288 = vsel %vm160, 1, 0
    %v289 = vsel %vm161, 1, 0
    %v290 = vsel %vm162, 1, 0
    %v291 = vsel %vm163, 1, 0
    %v292 = vsel %vm164, 1, 0
    %v293 = vsel %vm165, 1, 0
    %v294 = vsel %vm166, 1, 0
    %v295 = vsel %vm167, 1, 0
    %v296 = vsel %vm168, 1, 0
    %v297 = vsel %vm169, 1, 0
    %v298 = vsel %vm170, 1, 0
    %v299 = vsel %vm171, 1, 0
    %v300 = vsel %vm172, 1, 0
    %v301 = vsel %vm173, 1, 0
    %v302 = vsel %vm174, 1, 0
    %v303 = vsel %vm175, 1, 0
    %v304 = vsel %vm176, 1, 0
    %v305 = vsel %vm177, 1, 0
    %v306 = vsel %vm178, 1, 0
    %v307 = vsel %vm179, 1, 0
    %v308 = vsel %vm180, 1, 0
    %v309 = vsel %vm181, 1, 0
    %v310 = vsel %vm182, 1, 0
    %v311 = vsel %vm183, 1, 0
    %v312 = vsel %vm184, 1, 0
    %v313 = vsel %vm185, 1, 0
    %v314 = vsel %vm186, 1, 0
    %v315 = vsel %vm187, 1, 0
    %v316 = vsel %vm188, 1, 0
    %v317 = vsel %vm189, 1, 0
    %v318 = vsel %vm190, 1, 0
    %v319 = vsel %vm191, 1, 0
    %v320 = vsel %vm192, 1, 0
    %v321 = vsel %vm193, 1, 0
    %v322 = vsel %vm194, 1, 0
    %v323 = vsel %vm195, 1, 0
    %v324 = vsel %vm196, 1, 0
    %v325 = vsel %vm197, 1, 0
    %v326 = vsel %vm198, 1, 0
    %v327 = vsel %vm199, 1, 0
    %v328 = vsel %vm200, 1, 0
    %v329 = vsel %vm201, 1, 0
    %v330 = vsel %vm202, 1, 0
    %v331 = vsel %vm203, 1, 0
    %v332 = vsel %vm204, 1, 0
    %v333 = vsel %vm205, 1, 0
    %v334 = vsel %vm206, 1, 0
    %v335 = vsel %vm207, 1, 0
    %v336 = vsel %vm208, 1, 0
    %v337 = vsel %vm209, 1, 0
    %v338 = vsel %vm210, 1, 0
    %v339 = vperm.slane %v42, 0
    %v340 = vperm.slane %v50, 0
    %v341 = vperm.slane %v51, 0
    %v342 = vperm.slane %v52, 0
    %v343 = vperm.slane %v53, 0
    %v344 = vperm.slane %v54, 0
    %v345 = vperm.slane %v55, 0
    %v346 = vperm.slane %v56, 0
    %v347 = vperm.slane %v43, 0
    %v348 = vperm.slane %v57, 0
    %v349 = vperm.slane %v58, 0
    %v350 = vperm.slane %v59, 0
    %v351 = vperm.slane %v60, 0
    %v352 = vperm.slane %v61, 0
    %v353 = vperm.slane %v62, 0
    %v354 = vperm.slane %v63, 0
    %v355 = vperm.slane %v44, 0
    %v356 = vperm.slane %v64, 0
    %v357 = vperm.slane %v65, 0
    %v358 = vperm.slane %v66, 0
    %v359 = vperm.slane %v67, 0
    %v360 = vperm.slane %v68, 0
    %v361 = vperm.slane %v69, 0
    %v362 = vperm.slane %v70, 0
    %v363 = vperm.slane %v45, 0
    %v364 = vperm.slane %v71, 0
    %v365 = vperm.slane %v72, 0
    %v366 = vperm.slane %v73, 0
    %v367 = vperm.slane %v74, 0
    %v368 = vperm.slane %v75, 0
    %v369 = vperm.slane %v76, 0
    %v370 = vperm.slane %v77, 0
    %vm403 = vcmp.gt.f32.partialorder %v339, %v42
    %vm404 = vcmp.gt.f32.partialorder %v339, %v43
    %vm405 = vcmp.gt.f32.partialorder %v339, %v44
    %vm406 = vcmp.gt.f32.partialorder %v339, %v45
    %vm407 = vcmp.gt.f32.partialorder %v340, %v42
    %vm408 = vcmp.gt.f32.partialorder %v340, %v43
    %vm409 = vcmp.gt.f32.partialorder %v340, %v44
    %vm410 = vcmp.gt.f32.partialorder %v340, %v45
    %vm411 = vcmp.gt.f32.partialorder %v341, %v42
    %vm412 = vcmp.gt.f32.partialorder %v341, %v43
    %vm413 = vcmp.gt.f32.partialorder %v341, %v44
    %vm414 = vcmp.gt.f32.partialorder %v341, %v45
    %vm415 = vcmp.gt.f32.partialorder %v342, %v42
    %vm416 = vcmp.gt.f32.partialorder %v342, %v43
    %vm417 = vcmp.gt.f32.partialorder %v342, %v44
    %vm418 = vcmp.gt.f32.partialorder %v342, %v45
    %vm419 = vcmp.gt.f32.partialorder %v343, %v42
    %vm420 = vcmp.gt.f32.partialorder %v343, %v43
    %vm421 = vcmp.gt.f32.partialorder %v343, %v44
    %vm422 = vcmp.gt.f32.partialorder %v343, %v45
    %vm423 = vcmp.gt.f32.partialorder %v344, %v42
    %vm424 = vcmp.gt.f32.partialorder %v344, %v43
    %vm425 = vcmp.gt.f32.partialorder %v344, %v44
    %vm426 = vcmp.gt.f32.partialorder %v344, %v45
    %vm427 = vcmp.gt.f32.partialorder %v345, %v42
    %vm428 = vcmp.gt.f32.partialorder %v345, %v43
    %vm429 = vcmp.gt.f32.partialorder %v345, %v44
    %vm430 = vcmp.gt.f32.partialorder %v345, %v45
    %vm431 = vcmp.gt.f32.partialorder %v346, %v42
    %vm432 = vcmp.gt.f32.partialorder %v346, %v43
    %vm433 = vcmp.gt.f32.partialorder %v346, %v44
    %vm434 = vcmp.gt.f32.partialorder %v346, %v45
    %vm435 = vcmp.gt.f32.partialorder %v347, %v42
    %vm436 = vcmp.gt.f32.partialorder %v347, %v43
    %vm437 = vcmp.gt.f32.partialorder %v347, %v44
    %vm438 = vcmp.gt.f32.partialorder %v347, %v45
    %vm439 = vcmp.gt.f32.partialorder %v348, %v42
    %vm440 = vcmp.gt.f32.partialorder %v348, %v43
    %vm441 = vcmp.gt.f32.partialorder %v348, %v44
    %vm442 = vcmp.gt.f32.partialorder %v348, %v45
    %vm443 = vcmp.gt.f32.partialorder %v349, %v42
    %vm444 = vcmp.gt.f32.partialorder %v349, %v43
    %vm445 = vcmp.gt.f32.partialorder %v349, %v44
    %vm446 = vcmp.gt.f32.partialorder %v349, %v45
    %vm447 = vcmp.gt.f32.partialorder %v350, %v42
    %vm448 = vcmp.gt.f32.partialorder %v350, %v43
    %vm449 = vcmp.gt.f32.partialorder %v350, %v44
    %vm450 = vcmp.gt.f32.partialorder %v350, %v45
    %vm451 = vcmp.gt.f32.partialorder %v351, %v42
    %vm452 = vcmp.gt.f32.partialorder %v351, %v43
    %vm453 = vcmp.gt.f32.partialorder %v351, %v44
    %vm454 = vcmp.gt.f32.partialorder %v351, %v45
    %vm455 = vcmp.gt.f32.partialorder %v352, %v42
    %vm456 = vcmp.gt.f32.partialorder %v352, %v43
    %vm457 = vcmp.gt.f32.partialorder %v352, %v44
    %vm458 = vcmp.gt.f32.partialorder %v352, %v45
    %vm459 = vcmp.gt.f32.partialorder %v353, %v42
    %vm460 = vcmp.gt.f32.partialorder %v353, %v43
    %vm461 = vcmp.gt.f32.partialorder %v353, %v44
    %vm462 = vcmp.gt.f32.partialorder %v353, %v45
    %vm463 = vcmp.gt.f32.partialorder %v354, %v42
    %vm464 = vcmp.gt.f32.partialorder %v354, %v43
    %vm465 = vcmp.gt.f32.partialorder %v354, %v44
    %vm466 = vcmp.gt.f32.partialorder %v354, %v45
    %vm467 = vcmp.gt.f32.partialorder %v355, %v42
    %vm468 = vcmp.gt.f32.partialorder %v355, %v43
    %vm469 = vcmp.gt.f32.partialorder %v355, %v44
    %vm470 = vcmp.gt.f32.partialorder %v355, %v45
    %vm471 = vcmp.gt.f32.partialorder %v356, %v42
    %vm472 = vcmp.gt.f32.partialorder %v356, %v43
    %vm473 = vcmp.gt.f32.partialorder %v356, %v44
    %vm474 = vcmp.gt.f32.partialorder %v356, %v45
    %vm475 = vcmp.gt.f32.partialorder %v357, %v42
    %vm476 = vcmp.gt.f32.partialorder %v357, %v43
    %vm477 = vcmp.gt.f32.partialorder %v357, %v44
    %vm478 = vcmp.gt.f32.partialorder %v357, %v45
    %vm479 = vcmp.gt.f32.partialorder %v358, %v42
    %vm480 = vcmp.gt.f32.partialorder %v358, %v43
    %vm481 = vcmp.gt.f32.partialorder %v358, %v44
    %vm482 = vcmp.gt.f32.partialorder %v358, %v45
    %vm483 = vcmp.gt.f32.partialorder %v359, %v42
    %vm484 = vcmp.gt.f32.partialorder %v359, %v43
    %vm485 = vcmp.gt.f32.partialorder %v359, %v44
    %vm486 = vcmp.gt.f32.partialorder %v359, %v45
    %vm487 = vcmp.gt.f32.partialorder %v360, %v42
    %vm488 = vcmp.gt.f32.partialorder %v360, %v43
    %vm489 = vcmp.gt.f32.partialorder %v360, %v44
    %vm490 = vcmp.gt.f32.partialorder %v360, %v45
    %vm491 = vcmp.gt.f32.partialorder %v361, %v42
    %vm492 = vcmp.gt.f32.partialorder %v361, %v43
    %vm493 = vcmp.gt.f32.partialorder %v361, %v44
    %vm494 = vcmp.gt.f32.partialorder %v361, %v45
    %vm495 = vcmp.gt.f32.partialorder %v362, %v42
    %vm496 = vcmp.gt.f32.partialorder %v362, %v43
    %vm497 = vcmp.gt.f32.partialorder %v362, %v44
    %vm498 = vcmp.gt.f32.partialorder %v362, %v45
    %vm499 = vcmp.gt.f32.partialorder %v363, %v42
    %vm500 = vcmp.gt.f32.partialorder %v363, %v43
    %vm501 = vcmp.gt.f32.partialorder %v363, %v44
    %vm502 = vcmp.gt.f32.partialorder %v363, %v45
    %vm503 = vcmp.gt.f32.partialorder %v364, %v42
    %vm504 = vcmp.gt.f32.partialorder %v364, %v43
    %vm505 = vcmp.gt.f32.partialorder %v364, %v44
    %vm506 = vcmp.gt.f32.partialorder %v364, %v45
    %vm507 = vcmp.gt.f32.partialorder %v365, %v42
    %vm508 = vcmp.gt.f32.partialorder %v365, %v43
    %vm509 = vcmp.gt.f32.partialorder %v365, %v44
    %vm510 = vcmp.gt.f32.partialorder %v365, %v45
    %vm511 = vcmp.gt.f32.partialorder %v366, %v42
    %vm512 = vcmp.gt.f32.partialorder %v366, %v43
    %vm513 = vcmp.gt.f32.partialorder %v366, %v44
    %vm514 = vcmp.gt.f32.partialorder %v366, %v45
    %vm515 = vcmp.gt.f32.partialorder %v367, %v42
    %vm516 = vcmp.gt.f32.partialorder %v367, %v43
    %vm517 = vcmp.gt.f32.partialorder %v367, %v44
    %vm518 = vcmp.gt.f32.partialorder %v367, %v45
    %vm519 = vcmp.gt.f32.partialorder %v368, %v42
    %vm520 = vcmp.gt.f32.partialorder %v368, %v43
    %vm521 = vcmp.gt.f32.partialorder %v368, %v44
    %vm522 = vcmp.gt.f32.partialorder %v368, %v45
    %vm523 = vcmp.gt.f32.partialorder %v369, %v42
    %vm524 = vcmp.gt.f32.partialorder %v369, %v43
    %vm525 = vcmp.gt.f32.partialorder %v369, %v44
    %vm526 = vcmp.gt.f32.partialorder %v369, %v45
    %vm527 = vcmp.gt.f32.partialorder %v370, %v42
    %vm528 = vcmp.gt.f32.partialorder %v370, %v43
    %vm529 = vcmp.gt.f32.partialorder %v370, %v44
    %vm530 = vcmp.gt.f32.partialorder %v370, %v45
    %vm531 = vcmp.eq.f32.partialorder %v339, %v42
    %vm532 = vcmp.eq.f32.partialorder %v339, %v43
    %vm533 = vcmp.eq.f32.partialorder %v339, %v44
    %vm534 = vcmp.eq.f32.partialorder %v339, %v45
    %vm535 = vcmp.eq.f32.partialorder %v340, %v42
    %vm536 = vcmp.eq.f32.partialorder %v340, %v43
    %vm537 = vcmp.eq.f32.partialorder %v340, %v44
    %vm538 = vcmp.eq.f32.partialorder %v340, %v45
    %vm539 = vcmp.eq.f32.partialorder %v341, %v42
    %vm540 = vcmp.eq.f32.partialorder %v341, %v43
    %vm541 = vcmp.eq.f32.partialorder %v341, %v44
    %vm542 = vcmp.eq.f32.partialorder %v341, %v45
    %vm543 = vcmp.eq.f32.partialorder %v342, %v42
    %vm544 = vcmp.eq.f32.partialorder %v342, %v43
    %vm545 = vcmp.eq.f32.partialorder %v342, %v44
    %vm546 = vcmp.eq.f32.partialorder %v342, %v45
    %vm547 = vcmp.eq.f32.partialorder %v343, %v42
    %vm548 = vcmp.eq.f32.partialorder %v343, %v43
    %vm549 = vcmp.eq.f32.partialorder %v343, %v44
    %vm550 = vcmp.eq.f32.partialorder %v343, %v45
    %vm551 = vcmp.eq.f32.partialorder %v344, %v42
    %vm552 = vcmp.eq.f32.partialorder %v344, %v43
    %vm553 = vcmp.eq.f32.partialorder %v344, %v44
    %vm554 = vcmp.eq.f32.partialorder %v344, %v45
    %vm555 = vcmp.eq.f32.partialorder %v345, %v42
    %vm556 = vcmp.eq.f32.partialorder %v345, %v43
    %vm557 = vcmp.eq.f32.partialorder %v345, %v44
    %vm558 = vcmp.eq.f32.partialorder %v345, %v45
    %vm559 = vcmp.eq.f32.partialorder %v346, %v42
    %vm560 = vcmp.eq.f32.partialorder %v346, %v43
    %vm561 = vcmp.eq.f32.partialorder %v346, %v44
    %vm562 = vcmp.eq.f32.partialorder %v346, %v45
    %vm563 = vcmp.eq.f32.partialorder %v347, %v42
    %vm564 = vcmp.eq.f32.partialorder %v347, %v43
    %vm565 = vcmp.eq.f32.partialorder %v347, %v44
    %vm566 = vcmp.eq.f32.partialorder %v347, %v45
    %vm567 = vcmp.eq.f32.partialorder %v348, %v42
    %vm568 = vcmp.eq.f32.partialorder %v348, %v43
    %vm569 = vcmp.eq.f32.partialorder %v348, %v44
    %vm570 = vcmp.eq.f32.partialorder %v348, %v45
    %vm571 = vcmp.eq.f32.partialorder %v349, %v42
    %vm572 = vcmp.eq.f32.partialorder %v349, %v43
    %vm573 = vcmp.eq.f32.partialorder %v349, %v44
    %vm574 = vcmp.eq.f32.partialorder %v349, %v45
    %vm575 = vcmp.eq.f32.partialorder %v350, %v42
    %vm576 = vcmp.eq.f32.partialorder %v350, %v43
    %vm577 = vcmp.eq.f32.partialorder %v350, %v44
    %vm578 = vcmp.eq.f32.partialorder %v350, %v45
    %vm579 = vcmp.eq.f32.partialorder %v351, %v42
    %vm580 = vcmp.eq.f32.partialorder %v351, %v43
    %vm581 = vcmp.eq.f32.partialorder %v351, %v44
    %vm582 = vcmp.eq.f32.partialorder %v351, %v45
    %vm583 = vcmp.eq.f32.partialorder %v352, %v42
    %vm584 = vcmp.eq.f32.partialorder %v352, %v43
    %vm585 = vcmp.eq.f32.partialorder %v352, %v44
    %vm586 = vcmp.eq.f32.partialorder %v352, %v45
    %vm587 = vcmp.eq.f32.partialorder %v353, %v42
    %vm588 = vcmp.eq.f32.partialorder %v353, %v43
    %vm589 = vcmp.eq.f32.partialorder %v353, %v44
    %vm590 = vcmp.eq.f32.partialorder %v353, %v45
    %vm591 = vcmp.eq.f32.partialorder %v354, %v42
    %vm592 = vcmp.eq.f32.partialorder %v354, %v43
    %vm593 = vcmp.eq.f32.partialorder %v354, %v44
    %vm594 = vcmp.eq.f32.partialorder %v354, %v45
    %vm595 = vcmp.eq.f32.partialorder %v355, %v42
    %vm596 = vcmp.eq.f32.partialorder %v355, %v43
    %vm597 = vcmp.eq.f32.partialorder %v355, %v44
    %vm598 = vcmp.eq.f32.partialorder %v355, %v45
    %vm599 = vcmp.eq.f32.partialorder %v356, %v42
    %vm600 = vcmp.eq.f32.partialorder %v356, %v43
    %vm601 = vcmp.eq.f32.partialorder %v356, %v44
    %vm602 = vcmp.eq.f32.partialorder %v356, %v45
    %vm603 = vcmp.eq.f32.partialorder %v357, %v42
    %vm604 = vcmp.eq.f32.partialorder %v357, %v43
    %vm605 = vcmp.eq.f32.partialorder %v357, %v44
    %vm606 = vcmp.eq.f32.partialorder %v357, %v45
    %vm607 = vcmp.eq.f32.partialorder %v358, %v42
    %vm608 = vcmp.eq.f32.partialorder %v358, %v43
    %vm609 = vcmp.eq.f32.partialorder %v358, %v44
    %vm610 = vcmp.eq.f32.partialorder %v358, %v45
    %vm611 = vcmp.eq.f32.partialorder %v359, %v42
    %vm612 = vcmp.eq.f32.partialorder %v359, %v43
    %vm613 = vcmp.eq.f32.partialorder %v359, %v44
    %vm614 = vcmp.eq.f32.partialorder %v359, %v45
    %vm615 = vcmp.eq.f32.partialorder %v360, %v42
    %vm616 = vcmp.eq.f32.partialorder %v360, %v43
    %vm617 = vcmp.eq.f32.partialorder %v360, %v44
    %vm618 = vcmp.eq.f32.partialorder %v360, %v45
    %vm619 = vcmp.eq.f32.partialorder %v361, %v42
    %vm620 = vcmp.eq.f32.partialorder %v361, %v43
    %vm621 = vcmp.eq.f32.partialorder %v361, %v44
    %vm622 = vcmp.eq.f32.partialorder %v361, %v45
    %vm623 = vcmp.eq.f32.partialorder %v362, %v42
    %vm624 = vcmp.eq.f32.partialorder %v362, %v43
    %vm625 = vcmp.eq.f32.partialorder %v362, %v44
    %vm626 = vcmp.eq.f32.partialorder %v362, %v45
    %vm627 = vcmp.eq.f32.partialorder %v363, %v42
    %vm628 = vcmp.eq.f32.partialorder %v363, %v43
    %vm629 = vcmp.eq.f32.partialorder %v363, %v44
    %vm630 = vcmp.eq.f32.partialorder %v363, %v45
    %vm631 = vcmp.eq.f32.partialorder %v364, %v42
    %vm632 = vcmp.eq.f32.partialorder %v364, %v43
    %vm633 = vcmp.eq.f32.partialorder %v364, %v44
    %vm634 = vcmp.eq.f32.partialorder %v364, %v45
    %vm635 = vcmp.eq.f32.partialorder %v365, %v42
    %vm636 = vcmp.eq.f32.partialorder %v365, %v43
    %vm637 = vcmp.eq.f32.partialorder %v365, %v44
    %vm638 = vcmp.eq.f32.partialorder %v365, %v45
    %vm639 = vcmp.eq.f32.partialorder %v366, %v42
    %vm640 = vcmp.eq.f32.partialorder %v366, %v43
    %vm641 = vcmp.eq.f32.partialorder %v366, %v44
    %vm642 = vcmp.eq.f32.partialorder %v366, %v45
    %vm643 = vcmp.eq.f32.partialorder %v367, %v42
    %vm644 = vcmp.eq.f32.partialorder %v367, %v43
    %vm645 = vcmp.eq.f32.partialorder %v367, %v44
    %vm646 = vcmp.eq.f32.partialorder %v367, %v45
    %vm647 = vcmp.eq.f32.partialorder %v368, %v42
    %vm648 = vcmp.eq.f32.partialorder %v368, %v43
    %vm649 = vcmp.eq.f32.partialorder %v368, %v44
    %vm650 = vcmp.eq.f32.partialorder %v368, %v45
    %vm651 = vcmp.eq.f32.partialorder %v369, %v42
    %vm652 = vcmp.eq.f32.partialorder %v369, %v43
    %vm653 = vcmp.eq.f32.partialorder %v369, %v44
    %vm654 = vcmp.eq.f32.partialorder %v369, %v45
    %vm655 = vcmp.eq.f32.partialorder %v370, %v42
    %vm656 = vcmp.eq.f32.partialorder %v370, %v43
    %vm657 = vcmp.eq.f32.partialorder %v370, %v44
    %vm658 = vcmp.eq.f32.partialorder %v370, %v45
    %v659 = vsel %vm531, %v211, 0
    %v660 = vsel %vm532, %v212, 0
    %v661 = vsel %vm533, %v213, 0
    %v662 = vsel %vm534, %v214, 0
    %v663 = vsel %vm535, %v215, 0
    %v664 = vsel %vm536, %v216, 0
    %v665 = vsel %vm537, %v217, 0
    %v666 = vsel %vm538, %v218, 0
    %v667 = vsel %vm539, %v219, 0
    %v668 = vsel %vm540, %v220, 0
    %v669 = vsel %vm541, %v221, 0
    %v670 = vsel %vm542, %v222, 0
    %v671 = vsel %vm543, %v223, 0
    %v672 = vsel %vm544, %v224, 0
    %v673 = vsel %vm545, %v225, 0
    %v674 = vsel %vm546, %v226, 0
    %v675 = vsel %vm547, %v227, 0
    %v676 = vsel %vm548, %v228, 0
    %v677 = vsel %vm549, %v229, 0
    %v678 = vsel %vm550, %v230, 0
    %v679 = vsel %vm551, %v231, 0
    %v680 = vsel %vm552, %v232, 0
    %v681 = vsel %vm553, %v233, 0
    %v682 = vsel %vm554, %v234, 0
    %v683 = vsel %vm555, %v235, 0
    %v684 = vsel %vm556, %v236, 0
    %v685 = vsel %vm557, %v237, 0
    %v686 = vsel %vm558, %v238, 0
    %v687 = vsel %vm559, %v239, 0
    %v688 = vsel %vm560, %v240, 0
    %v689 = vsel %vm561, %v241, 0
    %v690 = vsel %vm562, %v242, 0
    %v691 = vsel %vm563, %v243, 0
    %v692 = vsel %vm564, %v244, 0
    %v693 = vsel %vm565, %v245, 0
    %v694 = vsel %vm566, %v246, 0
    %v695 = vsel %vm567, %v247, 0
    %v696 = vsel %vm568, %v248, 0
    %v697 = vsel %vm569, %v249, 0
    %v698 = vsel %vm570, %v250, 0
    %v699 = vsel %vm571, %v251, 0
    %v700 = vsel %vm572, %v252, 0
    %v701 = vsel %vm573, %v253, 0
    %v702 = vsel %vm574, %v254, 0
    %v703 = vsel %vm575, %v255, 0
    %v704 = vsel %vm576, %v256, 0
    %v705 = vsel %vm577, %v257, 0
    %v706 = vsel %vm578, %v258, 0
    %v707 = vsel %vm579, %v259, 0
    %v708 = vsel %vm580, %v260, 0
    %v709 = vsel %vm581, %v261, 0
    %v710 = vsel %vm582, %v262, 0
    %v711 = vsel %vm583, %v263, 0
    %v712 = vsel %vm584, %v264, 0
    %v713 = vsel %vm585, %v265, 0
    %v714 = vsel %vm586, %v266, 0
    %v715 = vsel %vm587, %v267, 0
    %v716 = vsel %vm588, %v268, 0
    %v717 = vsel %vm589, %v269, 0
    %v718 = vsel %vm590, %v270, 0
    %v719 = vsel %vm591, %v271, 0
    %v720 = vsel %vm592, %v272, 0
    %v721 = vsel %vm593, %v273, 0
    %v722 = vsel %vm594, %v274, 0
    %v723 = vsel %vm595, %v275, 0
    %v724 = vsel %vm596, %v276, 0
    %v725 = vsel %vm597, %v277, 0
    %v726 = vsel %vm598, %v278, 0
    %v727 = vsel %vm599, %v279, 0
    %v728 = vsel %vm600, %v280, 0
    %v729 = vsel %vm601, %v281, 0
    %v730 = vsel %vm602, %v282, 0
    %v731 = vsel %vm603, %v283, 0
    %v732 = vsel %vm604, %v284, 0
    %v733 = vsel %vm605, %v285, 0
    %v734 = vsel %vm606, %v286, 0
    %v735 = vsel %vm607, %v287, 0
    %v736 = vsel %vm608, %v288, 0
    %v737 = vsel %vm609, %v289, 0
    %v738 = vsel %vm610, %v290, 0
    %v739 = vsel %vm611, %v291, 0
    %v740 = vsel %vm612, %v292, 0
    %v741 = vsel %vm613, %v293, 0
    %v742 = vsel %vm614, %v294, 0
    %v743 = vsel %vm615, %v295, 0
    %v744 = vsel %vm616, %v296, 0
    %v745 = vsel %vm617, %v297, 0
    %v746 = vsel %vm618, %v298, 0
    %v747 = vsel %vm619, %v299, 0
    %v748 = vsel %vm620, %v300, 0
    %v749 = vsel %vm621, %v301, 0
    %v750 = vsel %vm622, %v302, 0
    %v751 = vsel %vm623, %v303, 0
    %v752 = vsel %vm624, %v304, 0
    %v753 = vsel %vm625, %v305, 0
    %v754 = vsel %vm626, %v306, 0
    %v755 = vsel %vm627, %v307, 0
    %v756 = vsel %vm628, %v308, 0
    %v757 = vsel %vm629, %v309, 0
    %v758 = vsel %vm630, %v310, 0
    %v759 = vsel %vm631, %v311, 0
    %v760 = vsel %vm632, %v312, 0
    %v761 = vsel %vm633, %v313, 0
    %v762 = vsel %vm634, %v314, 0
    %v763 = vsel %vm635, %v315, 0
    %v764 = vsel %vm636, %v316, 0
    %v765 = vsel %vm637, %v317, 0
    %v766 = vsel %vm638, %v318, 0
    %v767 = vsel %vm639, %v319, 0
    %v768 = vsel %vm640, %v320, 0
    %v769 = vsel %vm641, %v321, 0
    %v770 = vsel %vm642, %v322, 0
    %v771 = vsel %vm643, %v323, 0
    %v772 = vsel %vm644, %v324, 0
    %v773 = vsel %vm645, %v325, 0
    %v774 = vsel %vm646, %v326, 0
    %v775 = vsel %vm647, %v327, 0
    %v776 = vsel %vm648, %v328, 0
    %v777 = vsel %vm649, %v329, 0
    %v778 = vsel %vm650, %v330, 0
    %v779 = vsel %vm651, %v331, 0
    %v780 = vsel %vm652, %v332, 0
    %v781 = vsel %vm653, %v333, 0
    %v782 = vsel %vm654, %v334, 0
    %v783 = vsel %vm655, %v335, 0
    %v784 = vsel %vm656, %v336, 0
    %v785 = vsel %vm657, %v337, 0
    %v786 = vsel %vm658, %v338, 0
    %v787 = vsel %vm403, 1, %v659
    %v788 = vsel %vm404, 1, %v660
    %v789 = vsel %vm405, 1, %v661
    %v790 = vsel %vm406, 1, %v662
    %v791 = vsel %vm407, 1, %v663
    %v792 = vsel %vm408, 1, %v664
    %v793 = vsel %vm409, 1, %v665
    %v794 = vsel %vm410, 1, %v666
    %v795 = vsel %vm411, 1, %v667
    %v796 = vsel %vm412, 1, %v668
    %v797 = vsel %vm413, 1, %v669
    %v798 = vsel %vm414, 1, %v670
    %v799 = vsel %vm415, 1, %v671
    %v800 = vsel %vm416, 1, %v672
    %v801 = vsel %vm417, 1, %v673
    %v802 = vsel %vm418, 1, %v674
    %v803 = vsel %vm419, 1, %v675
    %v804 = vsel %vm420, 1, %v676
    %v805 = vsel %vm421, 1, %v677
    %v806 = vsel %vm422, 1, %v678
    %v807 = vsel %vm423, 1, %v679
    %v808 = vsel %vm424, 1, %v680
    %v809 = vsel %vm425, 1, %v681
    %v810 = vsel %vm426, 1, %v682
    %v811 = vsel %vm427, 1, %v683
    %v812 = vsel %vm428, 1, %v684
    %v813 = vsel %vm429, 1, %v685
    %v814 = vsel %vm430, 1, %v686
    %v815 = vsel %vm431, 1, %v687
    %v816 = vsel %vm432, 1, %v688
    %v817 = vsel %vm433, 1, %v689
    %v818 = vsel %vm434, 1, %v690
    %v819 = vsel %vm435, 1, %v691
    %v820 = vsel %vm436, 1, %v692
    %v821 = vsel %vm437, 1, %v693
    %v822 = vsel %vm438, 1, %v694
    %v823 = vsel %vm439, 1, %v695
    %v824 = vsel %vm440, 1, %v696
    %v825 = vsel %vm441, 1, %v697
    %v826 = vsel %vm442, 1, %v698
    %v827 = vsel %vm443, 1, %v699
    %v828 = vsel %vm444, 1, %v700
    %v829 = vsel %vm445, 1, %v701
    %v830 = vsel %vm446, 1, %v702
    %v831 = vsel %vm447, 1, %v703
    %v832 = vsel %vm448, 1, %v704
    %v833 = vsel %vm449, 1, %v705
    %v834 = vsel %vm450, 1, %v706
    %v835 = vsel %vm451, 1, %v707
    %v836 = vsel %vm452, 1, %v708
    %v837 = vsel %vm453, 1, %v709
    %v838 = vsel %vm454, 1, %v710
    %v839 = vsel %vm455, 1, %v711
    %v840 = vsel %vm456, 1, %v712
    %v841 = vsel %vm457, 1, %v713
    %v842 = vsel %vm458, 1, %v714
    %v843 = vsel %vm459, 1, %v715
    %v844 = vsel %vm460, 1, %v716
    %v845 = vsel %vm461, 1, %v717
    %v846 = vsel %vm462, 1, %v718
    %v847 = vsel %vm463, 1, %v719
    %v848 = vsel %vm464, 1, %v720
    %v849 = vsel %vm465, 1, %v721
    %v850 = vsel %vm466, 1, %v722
    %v851 = vsel %vm467, 1, %v723
    %v852 = vsel %vm468, 1, %v724
    %v853 = vsel %vm469, 1, %v725
    %v854 = vsel %vm470, 1, %v726
    %v855 = vsel %vm471, 1, %v727
    %v856 = vsel %vm472, 1, %v728
    %v857 = vsel %vm473, 1, %v729
    %v858 = vsel %vm474, 1, %v730
    %v859 = vsel %vm475, 1, %v731
    %v860 = vsel %vm476, 1, %v732
    %v861 = vsel %vm477, 1, %v733
    %v862 = vsel %vm478, 1, %v734
    %v863 = vsel %vm479, 1, %v735
    %v864 = vsel %vm480, 1, %v736
    %v865 = vsel %vm481, 1, %v737
    %v866 = vsel %vm482, 1, %v738
    %v867 = vsel %vm483, 1, %v739
    %v868 = vsel %vm484, 1, %v740
    %v869 = vsel %vm485, 1, %v741
    %v870 = vsel %vm486, 1, %v742
    %v871 = vsel %vm487, 1, %v743
    %v872 = vsel %vm488, 1, %v744
    %v873 = vsel %vm489, 1, %v745
    %v874 = vsel %vm490, 1, %v746
    %v875 = vsel %vm491, 1, %v747
    %v876 = vsel %vm492, 1, %v748
    %v877 = vsel %vm493, 1, %v749
    %v878 = vsel %vm494, 1, %v750
    %v879 = vsel %vm495, 1, %v751
    %v880 = vsel %vm496, 1, %v752
    %v881 = vsel %vm497, 1, %v753
    %v882 = vsel %vm498, 1, %v754
    %v883 = vsel %vm499, 1, %v755
    %v884 = vsel %vm500, 1, %v756
    %v885 = vsel %vm501, 1, %v757
    %v886 = vsel %vm502, 1, %v758
    %v887 = vsel %vm503, 1, %v759
    %v888 = vsel %vm504, 1, %v760
    %v889 = vsel %vm505, 1, %v761
    %v890 = vsel %vm506, 1, %v762
    %v891 = vsel %vm507, 1, %v763
    %v892 = vsel %vm508, 1, %v764
    %v893 = vsel %vm509, 1, %v765
    %v894 = vsel %vm510, 1, %v766
    %v895 = vsel %vm511, 1, %v767
    %v896 = vsel %vm512, 1, %v768
    %v897 = vsel %vm513, 1, %v769
    %v898 = vsel %vm514, 1, %v770
    %v899 = vsel %vm515, 1, %v771
    %v900 = vsel %vm516, 1, %v772
    %v901 = vsel %vm517, 1, %v773
    %v902 = vsel %vm518, 1, %v774
    %v903 = vsel %vm519, 1, %v775
    %v904 = vsel %vm520, 1, %v776
    %v905 = vsel %vm521, 1, %v777
    %v906 = vsel %vm522, 1, %v778
    %v907 = vsel %vm523, 1, %v779
    %v908 = vsel %vm524, 1, %v780
    %v909 = vsel %vm525, 1, %v781
    %v910 = vsel %vm526, 1, %v782
    %v911 = vsel %vm527, 1, %v783
    %v912 = vsel %vm528, 1, %v784
    %v913 = vsel %vm529, 1, %v785
    %v914 = vsel %vm530, 1, %v786
    %v915 = vadd.s32 %v787, %v791
    %v916 = vadd.s32 %v915, %v795
    %v917 = vadd.s32 %v916, %v799
    %v918 = vadd.s32 %v917, %v803
    %v919 = vadd.s32 %v918, %v807
    %v920 = vadd.s32 %v919, %v811
    %v921 = vadd.s32 %v920, %v815
    %v922 = vadd.s32 %v921, %v819
    %v923 = vadd.s32 %v922, %v823
    %v924 = vadd.s32 %v923, %v827
    %v925 = vadd.s32 %v924, %v831
    %v926 = vadd.s32 %v925, %v835
    %v927 = vadd.s32 %v926, %v839
    %v928 = vadd.s32 %v927, %v843
    %v929 = vadd.s32 %v928, %v847
    %v930 = vadd.s32 %v929, %v851
    %v931 = vadd.s32 %v930, %v855
    %v932 = vadd.s32 %v931, %v859
    %v933 = vadd.s32 %v932, %v863
    %v934 = vadd.s32 %v933, %v867
    %v935 = vadd.s32 %v934, %v871
    %v936 = vadd.s32 %v935, %v875
    %v937 = vadd.s32 %v936, %v879
    %v938 = vadd.s32 %v937, %v883
    %v939 = vadd.s32 %v938, %v887
    %v940 = vadd.s32 %v939, %v891
    %v941 = vadd.s32 %v940, %v895
    %v942 = vadd.s32 %v941, %v899
    %v943 = vadd.s32 %v942, %v903
    %v944 = vadd.s32 %v943, %v907
    %v945 = vadd.s32 %v944, %v911
    %v946 = vadd.s32 %v788, %v792
    %v947 = vadd.s32 %v946, %v796
    %v948 = vadd.s32 %v947, %v800
    %v949 = vadd.s32 %v948, %v804
    %v950 = vadd.s32 %v949, %v808
    %v951 = vadd.s32 %v950, %v812
    %v952 = vadd.s32 %v951, %v816
    %v953 = vadd.s32 %v952, %v820
    %v954 = vadd.s32 %v953, %v824
    %v955 = vadd.s32 %v954, %v828
    %v956 = vadd.s32 %v955, %v832
    %v957 = vadd.s32 %v956, %v836
    %v958 = vadd.s32 %v957, %v840
    %v959 = vadd.s32 %v958, %v844
    %v960 = vadd.s32 %v959, %v848
    %v961 = vadd.s32 %v960, %v852
    %v962 = vadd.s32 %v961, %v856
    %v963 = vadd.s32 %v962, %v860
    %v964 = vadd.s32 %v963, %v864
    %v965 = vadd.s32 %v964, %v868
    %v966 = vadd.s32 %v965, %v872
    %v967 = vadd.s32 %v966, %v876
    %v968 = vadd.s32 %v967, %v880
    %v969 = vadd.s32 %v968, %v884
    %v970 = vadd.s32 %v969, %v888
    %v971 = vadd.s32 %v970, %v892
    %v972 = vadd.s32 %v971, %v896
    %v973 = vadd.s32 %v972, %v900
    %v974 = vadd.s32 %v973, %v904
    %v975 = vadd.s32 %v974, %v908
    %v976 = vadd.s32 %v975, %v912
    %v977 = vadd.s32 %v789, %v793
    %v978 = vadd.s32 %v977, %v797
    %v979 = vadd.s32 %v978, %v801
    %v980 = vadd.s32 %v979, %v805
    %v981 = vadd.s32 %v980, %v809
    %v982 = vadd.s32 %v981, %v813
    %v983 = vadd.s32 %v982, %v817
    %v984 = vadd.s32 %v983, %v821
    %v985 = vadd.s32 %v984, %v825
    %v986 = vadd.s32 %v985, %v829
    %v987 = vadd.s32 %v986, %v833
    %v988 = vadd.s32 %v987, %v837
    %v989 = vadd.s32 %v988, %v841
    %v990 = vadd.s32 %v989, %v845
    %v991 = vadd.s32 %v990, %v849
    %v992 = vadd.s32 %v991, %v853
    %v993 = vadd.s32 %v992, %v857
    %v994 = vadd.s32 %v993, %v861
    %v995 = vadd.s32 %v994, %v865
    %v996 = vadd.s32 %v995, %v869
    %v997 = vadd.s32 %v996, %v873
    %v998 = vadd.s32 %v997, %v877
    %v999 = vadd.s32 %v998, %v881
    %v1000 = vadd.s32 %v999, %v885
    %v1001 = vadd.s32 %v1000, %v889
    %v1002 = vadd.s32 %v1001, %v893
    %v1003 = vadd.s32 %v1002, %v897
    %v1004 = vadd.s32 %v1003, %v901
    %v1005 = vadd.s32 %v1004, %v905
    %v1006 = vadd.s32 %v1005, %v909
    %v1007 = vadd.s32 %v1006, %v913
    %v1008 = vadd.s32 %v790, %v794
    %v1009 = vadd.s32 %v1008, %v798
    %v1010 = vadd.s32 %v1009, %v802
    %v1011 = vadd.s32 %v1010, %v806
    %v1012 = vadd.s32 %v1011, %v810
    %v1013 = vadd.s32 %v1012, %v814
    %v1014 = vadd.s32 %v1013, %v818
    %v1015 = vadd.s32 %v1014, %v822
    %v1016 = vadd.s32 %v1015, %v826
    %v1017 = vadd.s32 %v1016, %v830
    %v1018 = vadd.s32 %v1017, %v834
    %v1019 = vadd.s32 %v1018, %v838
    %v1020 = vadd.s32 %v1019, %v842
    %v1021 = vadd.s32 %v1020, %v846
    %v1022 = vadd.s32 %v1021, %v850
    %v1023 = vadd.s32 %v1022, %v854
    %v1024 = vadd.s32 %v1023, %v858
    %v1025 = vadd.s32 %v1024, %v862
    %v1026 = vadd.s32 %v1025, %v866
    %v1027 = vadd.s32 %v1026, %v870
    %v1028 = vadd.s32 %v1027, %v874
    %v1029 = vadd.s32 %v1028, %v878
    %v1030 = vadd.s32 %v1029, %v882
    %v1031 = vadd.s32 %v1030, %v886
    %v1032 = vadd.s32 %v1031, %v890
    %v1033 = vadd.s32 %v1032, %v894
    %v1034 = vadd.s32 %v1033, %v898
    %v1035 = vadd.s32 %v1034, %v902
    %v1036 = vadd.s32 %v1035, %v906
    %v1037 = vadd.s32 %v1036, %v910
    %v1038 = vadd.s32 %v1037, %v914
    %v1039 = vrot.slane %v945, 1
    %v1040 = vrot.slane %v945, 2
    %v1041 = vrot.slane %v945, 3
    %v1042 = vrot.slane %v945, 4
    %v1043 = vrot.slane %v945, 5
    %v1044 = vrot.slane %v945, 6
    %v1045 = vrot.slane %v945, 7
    %v1046 = vrot.slane %v976, 1
    %v1047 = vrot.slane %v976, 2
    %v1048 = vrot.slane %v976, 3
    %v1049 = vrot.slane %v976, 4
    %v1050 = vrot.slane %v976, 5
    %v1051 = vrot.slane %v976, 6
    %v1052 = vrot.slane %v976, 7
    %v1053 = vrot.slane %v1007, 1
    %v1054 = vrot.slane %v1007, 2
    %v1055 = vrot.slane %v1007, 3
    %v1056 = vrot.slane %v1007, 4
    %v1057 = vrot.slane %v1007, 5
    %v1058 = vrot.slane %v1007, 6
    %v1059 = vrot.slane %v1007, 7
    %v1060 = vrot.slane %v1038, 1
    %v1061 = vrot.slane %v1038, 2
    %v1062 = vrot.slane %v1038, 3
    %v1063 = vrot.slane %v1038, 4
    %v1064 = vrot.slane %v1038, 5
    %v1065 = vrot.slane %v1038, 6
    %v1066 = vrot.slane %v1038, 7
    %v1067 = vperm.slane %v945, 0
    %v1068 = vperm.slane %v1039, 0
    %v1069 = vperm.slane %v1040, 0
    %v1070 = vperm.slane %v1041, 0
    %v1071 = vperm.slane %v1042, 0
    %v1072 = vperm.slane %v1043, 0
    %v1073 = vperm.slane %v1044, 0
    %v1074 = vperm.slane %v1045, 0
    %v1075 = vperm.slane %v976, 0
    %v1076 = vperm.slane %v1046, 0
    %v1077 = vperm.slane %v1047, 0
    %v1078 = vperm.slane %v1048, 0
    %v1079 = vperm.slane %v1049, 0
    %v1080 = vperm.slane %v1050, 0
    %v1081 = vperm.slane %v1051, 0
    %v1082 = vperm.slane %v1052, 0
    %v1083 = vperm.slane %v1007, 0
    %v1084 = vperm.slane %v1053, 0
    %v1085 = vperm.slane %v1054, 0
    %v1086 = vperm.slane %v1055, 0
    %v1087 = vperm.slane %v1056, 0
    %v1088 = vperm.slane %v1057, 0
    %v1089 = vperm.slane %v1058, 0
    %v1090 = vperm.slane %v1059, 0
    %v1091 = vperm.slane %v1038, 0
    %v1092 = vperm.slane %v1060, 0
    %v1093 = vperm.slane %v1061, 0
    %v1094 = vperm.slane %v1062, 0
    %v1095 = vperm.slane %v1063, 0
    %v1096 = vperm.slane %v1064, 0
    %v1097 = vperm.slane %v1065, 0
    %v1098 = vperm.slane %v1066, 0
    %vm1099 = vcmp.eq.s32.totalorder %v1067, %v79
    %vm1100 = vcmp.eq.s32.totalorder %v1067, %v80
    %vm1101 = vcmp.eq.s32.totalorder %v1067, %v81
    %vm1102 = vcmp.eq.s32.totalorder %v1067, %v82
    %vm1103 = vcmp.eq.s32.totalorder %v1068, %v79
    %vm1104 = vcmp.eq.s32.totalorder %v1068, %v80
    %vm1105 = vcmp.eq.s32.totalorder %v1068, %v81
    %vm1106 = vcmp.eq.s32.totalorder %v1068, %v82
    %vm1107 = vcmp.eq.s32.totalorder %v1069, %v79
    %vm1108 = vcmp.eq.s32.totalorder %v1069, %v80
    %vm1109 = vcmp.eq.s32.totalorder %v1069, %v81
    %vm1110 = vcmp.eq.s32.totalorder %v1069, %v82
    %vm1111 = vcmp.eq.s32.totalorder %v1070, %v79
    %vm1112 = vcmp.eq.s32.totalorder %v1070, %v80
    %vm1113 = vcmp.eq.s32.totalorder %v1070, %v81
    %vm1114 = vcmp.eq.s32.totalorder %v1070, %v82
    %vm1115 = vcmp.eq.s32.totalorder %v1071, %v79
    %vm1116 = vcmp.eq.s32.totalorder %v1071, %v80
    %vm1117 = vcmp.eq.s32.totalorder %v1071, %v81
    %vm1118 = vcmp.eq.s32.totalorder %v1071, %v82
    %vm1119 = vcmp.eq.s32.totalorder %v1072, %v79
    %vm1120 = vcmp.eq.s32.totalorder %v1072, %v80
    %vm1121 = vcmp.eq.s32.totalorder %v1072, %v81
    %vm1122 = vcmp.eq.s32.totalorder %v1072, %v82
    %vm1123 = vcmp.eq.s32.totalorder %v1073, %v79
    %vm1124 = vcmp.eq.s32.totalorder %v1073, %v80
    %vm1125 = vcmp.eq.s32.totalorder %v1073, %v81
    %vm1126 = vcmp.eq.s32.totalorder %v1073, %v82
    %vm1127 = vcmp.eq.s32.totalorder %v1074, %v79
    %vm1128 = vcmp.eq.s32.totalorder %v1074, %v80
    %vm1129 = vcmp.eq.s32.totalorder %v1074, %v81
    %vm1130 = vcmp.eq.s32.totalorder %v1074, %v82
    %vm1131 = vcmp.eq.s32.totalorder %v1075, %v79
    %vm1132 = vcmp.eq.s32.totalorder %v1075, %v80
    %vm1133 = vcmp.eq.s32.totalorder %v1075, %v81
    %vm1134 = vcmp.eq.s32.totalorder %v1075, %v82
    %vm1135 = vcmp.eq.s32.totalorder %v1076, %v79
    %vm1136 = vcmp.eq.s32.totalorder %v1076, %v80
    %vm1137 = vcmp.eq.s32.totalorder %v1076, %v81
    %vm1138 = vcmp.eq.s32.totalorder %v1076, %v82
    %vm1139 = vcmp.eq.s32.totalorder %v1077, %v79
    %vm1140 = vcmp.eq.s32.totalorder %v1077, %v80
    %vm1141 = vcmp.eq.s32.totalorder %v1077, %v81
    %vm1142 = vcmp.eq.s32.totalorder %v1077, %v82
    %vm1143 = vcmp.eq.s32.totalorder %v1078, %v79
    %vm1144 = vcmp.eq.s32.totalorder %v1078, %v80
    %vm1145 = vcmp.eq.s32.totalorder %v1078, %v81
    %vm1146 = vcmp.eq.s32.totalorder %v1078, %v82
    %vm1147 = vcmp.eq.s32.totalorder %v1079, %v79
    %vm1148 = vcmp.eq.s32.totalorder %v1079, %v80
    %vm1149 = vcmp.eq.s32.totalorder %v1079, %v81
    %vm1150 = vcmp.eq.s32.totalorder %v1079, %v82
    %vm1151 = vcmp.eq.s32.totalorder %v1080, %v79
    %vm1152 = vcmp.eq.s32.totalorder %v1080, %v80
    %vm1153 = vcmp.eq.s32.totalorder %v1080, %v81
    %vm1154 = vcmp.eq.s32.totalorder %v1080, %v82
    %vm1155 = vcmp.eq.s32.totalorder %v1081, %v79
    %vm1156 = vcmp.eq.s32.totalorder %v1081, %v80
    %vm1157 = vcmp.eq.s32.totalorder %v1081, %v81
    %vm1158 = vcmp.eq.s32.totalorder %v1081, %v82
    %vm1159 = vcmp.eq.s32.totalorder %v1082, %v79
    %vm1160 = vcmp.eq.s32.totalorder %v1082, %v80
    %vm1161 = vcmp.eq.s32.totalorder %v1082, %v81
    %vm1162 = vcmp.eq.s32.totalorder %v1082, %v82
    %vm1163 = vcmp.eq.s32.totalorder %v1083, %v79
    %vm1164 = vcmp.eq.s32.totalorder %v1083, %v80
    %vm1165 = vcmp.eq.s32.totalorder %v1083, %v81
    %vm1166 = vcmp.eq.s32.totalorder %v1083, %v82
    %vm1167 = vcmp.eq.s32.totalorder %v1084, %v79
    %vm1168 = vcmp.eq.s32.totalorder %v1084, %v80
    %vm1169 = vcmp.eq.s32.totalorder %v1084, %v81
    %vm1170 = vcmp.eq.s32.totalorder %v1084, %v82
    %vm1171 = vcmp.eq.s32.totalorder %v1085, %v79
    %vm1172 = vcmp.eq.s32.totalorder %v1085, %v80
    %vm1173 = vcmp.eq.s32.totalorder %v1085, %v81
    %vm1174 = vcmp.eq.s32.totalorder %v1085, %v82
    %vm1175 = vcmp.eq.s32.totalorder %v1086, %v79
    %vm1176 = vcmp.eq.s32.totalorder %v1086, %v80
    %vm1177 = vcmp.eq.s32.totalorder %v1086, %v81
    %vm1178 = vcmp.eq.s32.totalorder %v1086, %v82
    %vm1179 = vcmp.eq.s32.totalorder %v1087, %v79
    %vm1180 = vcmp.eq.s32.totalorder %v1087, %v80
    %vm1181 = vcmp.eq.s32.totalorder %v1087, %v81
    %vm1182 = vcmp.eq.s32.totalorder %v1087, %v82
    %vm1183 = vcmp.eq.s32.totalorder %v1088, %v79
    %vm1184 = vcmp.eq.s32.totalorder %v1088, %v80
    %vm1185 = vcmp.eq.s32.totalorder %v1088, %v81
    %vm1186 = vcmp.eq.s32.totalorder %v1088, %v82
    %vm1187 = vcmp.eq.s32.totalorder %v1089, %v79
    %vm1188 = vcmp.eq.s32.totalorder %v1089, %v80
    %vm1189 = vcmp.eq.s32.totalorder %v1089, %v81
    %vm1190 = vcmp.eq.s32.totalorder %v1089, %v82
    %vm1191 = vcmp.eq.s32.totalorder %v1090, %v79
    %vm1192 = vcmp.eq.s32.totalorder %v1090, %v80
    %vm1193 = vcmp.eq.s32.totalorder %v1090, %v81
    %vm1194 = vcmp.eq.s32.totalorder %v1090, %v82
    %vm1195 = vcmp.eq.s32.totalorder %v1091, %v79
    %vm1196 = vcmp.eq.s32.totalorder %v1091, %v80
    %vm1197 = vcmp.eq.s32.totalorder %v1091, %v81
    %vm1198 = vcmp.eq.s32.totalorder %v1091, %v82
    %vm1199 = vcmp.eq.s32.totalorder %v1092, %v79
    %vm1200 = vcmp.eq.s32.totalorder %v1092, %v80
    %vm1201 = vcmp.eq.s32.totalorder %v1092, %v81
    %vm1202 = vcmp.eq.s32.totalorder %v1092, %v82
    %vm1203 = vcmp.eq.s32.totalorder %v1093, %v79
    %vm1204 = vcmp.eq.s32.totalorder %v1093, %v80
    %vm1205 = vcmp.eq.s32.totalorder %v1093, %v81
    %vm1206 = vcmp.eq.s32.totalorder %v1093, %v82
    %vm1207 = vcmp.eq.s32.totalorder %v1094, %v79
    %vm1208 = vcmp.eq.s32.totalorder %v1094, %v80
    %vm1209 = vcmp.eq.s32.totalorder %v1094, %v81
    %vm1210 = vcmp.eq.s32.totalorder %v1094, %v82
    %vm1211 = vcmp.eq.s32.totalorder %v1095, %v79
    %vm1212 = vcmp.eq.s32.totalorder %v1095, %v80
    %vm1213 = vcmp.eq.s32.totalorder %v1095, %v81
    %vm1214 = vcmp.eq.s32.totalorder %v1095, %v82
    %vm1215 = vcmp.eq.s32.totalorder %v1096, %v79
    %vm1216 = vcmp.eq.s32.totalorder %v1096, %v80
    %vm1217 = vcmp.eq.s32.totalorder %v1096, %v81
    %vm1218 = vcmp.eq.s32.totalorder %v1096, %v82
    %vm1219 = vcmp.eq.s32.totalorder %v1097, %v79
    %vm1220 = vcmp.eq.s32.totalorder %v1097, %v80
    %vm1221 = vcmp.eq.s32.totalorder %v1097, %v81
    %vm1222 = vcmp.eq.s32.totalorder %v1097, %v82
    %vm1223 = vcmp.eq.s32.totalorder %v1098, %v79
    %vm1224 = vcmp.eq.s32.totalorder %v1098, %v80
    %vm1225 = vcmp.eq.s32.totalorder %v1098, %v81
    %vm1226 = vcmp.eq.s32.totalorder %v1098, %v82
    %v1227 = vsel %vm1099, %v339, 0.0
    %v1228 = vsel %vm1100, %v339, 0.0
    %v1229 = vsel %vm1101, %v339, 0.0
    %v1230 = vsel %vm1102, %v339, 0.0
    %v1231 = vsel %vm1103, %v340, 0.0
    %v1232 = vsel %vm1104, %v340, 0.0
    %v1233 = vsel %vm1105, %v340, 0.0
    %v1234 = vsel %vm1106, %v340, 0.0
    %v1235 = vsel %vm1107, %v341, 0.0
    %v1236 = vsel %vm1108, %v341, 0.0
    %v1237 = vsel %vm1109, %v341, 0.0
    %v1238 = vsel %vm1110, %v341, 0.0
    %v1239 = vsel %vm1111, %v342, 0.0
    %v1240 = vsel %vm1112, %v342, 0.0
    %v1241 = vsel %vm1113, %v342, 0.0
    %v1242 = vsel %vm1114, %v342, 0.0
    %v1243 = vsel %vm1115, %v343, 0.0
    %v1244 = vsel %vm1116, %v343, 0.0
    %v1245 = vsel %vm1117, %v343, 0.0
    %v1246 = vsel %vm1118, %v343, 0.0
    %v1247 = vsel %vm1119, %v344, 0.0
    %v1248 = vsel %vm1120, %v344, 0.0
    %v1249 = vsel %vm1121, %v344, 0.0
    %v1250 = vsel %vm1122, %v344, 0.0
    %v1251 = vsel %vm1123, %v345, 0.0
    %v1252 = vsel %vm1124, %v345, 0.0
    %v1253 = vsel %vm1125, %v345, 0.0
    %v1254 = vsel %vm1126, %v345, 0.0
    %v1255 = vsel %vm1127, %v346, 0.0
    %v1256 = vsel %vm1128, %v346, 0.0
    %v1257 = vsel %vm1129, %v346, 0.0
    %v1258 = vsel %vm1130, %v346, 0.0
    %v1259 = vsel %vm1131, %v347, 0.0
    %v1260 = vsel %vm1132, %v347, 0.0
    %v1261 = vsel %vm1133, %v347, 0.0
    %v1262 = vsel %vm1134, %v347, 0.0
    %v1263 = vsel %vm1135, %v348, 0.0
    %v1264 = vsel %vm1136, %v348, 0.0
    %v1265 = vsel %vm1137, %v348, 0.0
    %v1266 = vsel %vm1138, %v348, 0.0
    %v1267 = vsel %vm1139, %v349, 0.0
    %v1268 = vsel %vm1140, %v349, 0.0
    %v1269 = vsel %vm1141, %v349, 0.0
    %v1270 = vsel %vm1142, %v349, 0.0
    %v1271 = vsel %vm1143, %v350, 0.0
    %v1272 = vsel %vm1144, %v350, 0.0
    %v1273 = vsel %vm1145, %v350, 0.0
    %v1274 = vsel %vm1146, %v350, 0.0
    %v1275 = vsel %vm1147, %v351, 0.0
    %v1276 = vsel %vm1148, %v351, 0.0
    %v1277 = vsel %vm1149, %v351, 0.0
    %v1278 = vsel %vm1150, %v351, 0.0
    %v1279 = vsel %vm1151, %v352, 0.0
    %v1280 = vsel %vm1152, %v352, 0.0
    %v1281 = vsel %vm1153, %v352, 0.0
    %v1282 = vsel %vm1154, %v352, 0.0
    %v1283 = vsel %vm1155, %v353, 0.0
    %v1284 = vsel %vm1156, %v353, 0.0
    %v1285 = vsel %vm1157, %v353, 0.0
    %v1286 = vsel %vm1158, %v353, 0.0
    %v1287 = vsel %vm1159, %v354, 0.0
    %v1288 = vsel %vm1160, %v354, 0.0
    %v1289 = vsel %vm1161, %v354, 0.0
    %v1290 = vsel %vm1162, %v354, 0.0
    %v1291 = vsel %vm1163, %v355, 0.0
    %v1292 = vsel %vm1164, %v355, 0.0
    %v1293 = vsel %vm1165, %v355, 0.0
    %v1294 = vsel %vm1166, %v355, 0.0
    %v1295 = vsel %vm1167, %v356, 0.0
    %v1296 = vsel %vm1168, %v356, 0.0
    %v1297 = vsel %vm1169, %v356, 0.0
    %v1298 = vsel %vm1170, %v356, 0.0
    %v1299 = vsel %vm1171, %v357, 0.0
    %v1300 = vsel %vm1172, %v357, 0.0
    %v1301 = vsel %vm1173, %v357, 0.0
    %v1302 = vsel %vm1174, %v357, 0.0
    %v1303 = vsel %vm1175, %v358, 0.0
    %v1304 = vsel %vm1176, %v358, 0.0
    %v1305 = vsel %vm1177, %v358, 0.0
    %v1306 = vsel %vm1178, %v358, 0.0
    %v1307 = vsel %vm1179, %v359, 0.0
    %v1308 = vsel %vm1180, %v359, 0.0
    %v1309 = vsel %vm1181, %v359, 0.0
    %v1310 = vsel %vm1182, %v359, 0.0
    %v1311 = vsel %vm1183, %v360, 0.0
    %v1312 = vsel %vm1184, %v360, 0.0
    %v1313 = vsel %vm1185, %v360, 0.0
    %v1314 = vsel %vm1186, %v360, 0.0
    %v1315 = vsel %vm1187, %v361, 0.0
    %v1316 = vsel %vm1188, %v361, 0.0
    %v1317 = vsel %vm1189, %v361, 0.0
    %v1318 = vsel %vm1190, %v361, 0.0
    %v1319 = vsel %vm1191, %v362, 0.0
    %v1320 = vsel %vm1192, %v362, 0.0
    %v1321 = vsel %vm1193, %v362, 0.0
    %v1322 = vsel %vm1194, %v362, 0.0
    %v1323 = vsel %vm1195, %v363, 0.0
    %v1324 = vsel %vm1196, %v363, 0.0
    %v1325 = vsel %vm1197, %v363, 0.0
    %v1326 = vsel %vm1198, %v363, 0.0
    %v1327 = vsel %vm1199, %v364, 0.0
    %v1328 = vsel %vm1200, %v364, 0.0
    %v1329 = vsel %vm1201, %v364, 0.0
    %v1330 = vsel %vm1202, %v364, 0.0
    %v1331 = vsel %vm1203, %v365, 0.0
    %v1332 = vsel %vm1204, %v365, 0.0
    %v1333 = vsel %vm1205, %v365, 0.0
    %v1334 = vsel %vm1206, %v365, 0.0
    %v1335 = vsel %vm1207, %v366, 0.0
    %v1336 = vsel %vm1208, %v366, 0.0
    %v1337 = vsel %vm1209, %v366, 0.0
    %v1338 = vsel %vm1210, %v366, 0.0
    %v1339 = vsel %vm1211, %v367, 0.0
    %v1340 = vsel %vm1212, %v367, 0.0
    %v1341 = vsel %vm1213, %v367, 0.0
    %v1342 = vsel %vm1214, %v367, 0.0
    %v1343 = vsel %vm1215, %v368, 0.0
    %v1344 = vsel %vm1216, %v368, 0.0
    %v1345 = vsel %vm1217, %v368, 0.0
    %v1346 = vsel %vm1218, %v368, 0.0
    %v1347 = vsel %vm1219, %v369, 0.0
    %v1348 = vsel %vm1220, %v369, 0.0
    %v1349 = vsel %vm1221, %v369, 0.0
    %v1350 = vsel %vm1222, %v369, 0.0
    %v1351 = vsel %vm1223, %v370, 0.0
    %v1352 = vsel %vm1224, %v370, 0.0
    %v1353 = vsel %vm1225, %v370, 0.0
    %v1354 = vsel %vm1226, %v370, 0.0
    %v1355 = vadd.f32 %v1227, %v1231
    %v1356 = vadd.f32 %v1355, %v1235
    %v1357 = vadd.f32 %v1356, %v1239
    %v1358 = vadd.f32 %v1357, %v1243
    %v1359 = vadd.f32 %v1358, %v1247
    %v1360 = vadd.f32 %v1359, %v1251
    %v1361 = vadd.f32 %v1360, %v1255
    %v1362 = vadd.f32 %v1361, %v1259
    %v1363 = vadd.f32 %v1362, %v1263
    %v1364 = vadd.f32 %v1363, %v1267
    %v1365 = vadd.f32 %v1364, %v1271
    %v1366 = vadd.f32 %v1365, %v1275
    %v1367 = vadd.f32 %v1366, %v1279
    %v1368 = vadd.f32 %v1367, %v1283
    %v1369 = vadd.f32 %v1368, %v1287
    %v1370 = vadd.f32 %v1369, %v1291
    %v1371 = vadd.f32 %v1370, %v1295
    %v1372 = vadd.f32 %v1371, %v1299
    %v1373 = vadd.f32 %v1372, %v1303
    %v1374 = vadd.f32 %v1373, %v1307
    %v1375 = vadd.f32 %v1374, %v1311
    %v1376 = vadd.f32 %v1375, %v1315
    %v1377 = vadd.f32 %v1376, %v1319
    %v1378 = vadd.f32 %v1377, %v1323
    %v1379 = vadd.f32 %v1378, %v1327
    %v1380 = vadd.f32 %v1379, %v1331
    %v1381 = vadd.f32 %v1380, %v1335
    %v1382 = vadd.f32 %v1381, %v1339
    %v1383 = vadd.f32 %v1382, %v1343
    %v1384 = vadd.f32 %v1383, %v1347
    %v1385 = vadd.f32 %v1384, %v1351
    %v1386 = vadd.f32 %v1228, %v1232
    %v1387 = vadd.f32 %v1386, %v1236
    %v1388 = vadd.f32 %v1387, %v1240
    %v1389 = vadd.f32 %v1388, %v1244
    %v1390 = vadd.f32 %v1389, %v1248
    %v1391 = vadd.f32 %v1390, %v1252
    %v1392 = vadd.f32 %v1391, %v1256
    %v1393 = vadd.f32 %v1392, %v1260
    %v1394 = vadd.f32 %v1393, %v1264
    %v1395 = vadd.f32 %v1394, %v1268
    %v1396 = vadd.f32 %v1395, %v1272
    %v1397 = vadd.f32 %v1396, %v1276
    %v1398 = vadd.f32 %v1397, %v1280
    %v1399 = vadd.f32 %v1398, %v1284
    %v1400 = vadd.f32 %v1399, %v1288
    %v1401 = vadd.f32 %v1400, %v1292
    %v1402 = vadd.f32 %v1401, %v1296
    %v1403 = vadd.f32 %v1402, %v1300
    %v1404 = vadd.f32 %v1403, %v1304
    %v1405 = vadd.f32 %v1404, %v1308
    %v1406 = vadd.f32 %v1405, %v1312
    %v1407 = vadd.f32 %v1406, %v1316
    %v1408 = vadd.f32 %v1407, %v1320
    %v1409 = vadd.f32 %v1408, %v1324
    %v1410 = vadd.f32 %v1409, %v1328
    %v1411 = vadd.f32 %v1410, %v1332
    %v1412 = vadd.f32 %v1411, %v1336
    %v1413 = vadd.f32 %v1412, %v1340
    %v1414 = vadd.f32 %v1413, %v1344
    %v1415 = vadd.f32 %v1414, %v1348
    %v1416 = vadd.f32 %v1415, %v1352
    %v1417 = vadd.f32 %v1229, %v1233
    %v1418 = vadd.f32 %v1417, %v1237
    %v1419 = vadd.f32 %v1418, %v1241
    %v1420 = vadd.f32 %v1419, %v1245
    %v1421 = vadd.f32 %v1420, %v1249
    %v1422 = vadd.f32 %v1421, %v1253
    %v1423 = vadd.f32 %v1422, %v1257
    %v1424 = vadd.f32 %v1423, %v1261
    %v1425 = vadd.f32 %v1424, %v1265
    %v1426 = vadd.f32 %v1425, %v1269
    %v1427 = vadd.f32 %v1426, %v1273
    %v1428 = vadd.f32 %v1427, %v1277
    %v1429 = vadd.f32 %v1428, %v1281
    %v1430 = vadd.f32 %v1429, %v1285
    %v1431 = vadd.f32 %v1430, %v1289
    %v1432 = vadd.f32 %v1431, %v1293
    %v1433 = vadd.f32 %v1432, %v1297
    %v1434 = vadd.f32 %v1433, %v1301
    %v1435 = vadd.f32 %v1434, %v1305
    %v1436 = vadd.f32 %v1435, %v1309
    %v1437 = vadd.f32 %v1436, %v1313
    %v1438 = vadd.f32 %v1437, %v1317
    %v1439 = vadd.f32 %v1438, %v1321
    %v1440 = vadd.f32 %v1439, %v1325
    %v1441 = vadd.f32 %v1440, %v1329
    %v1442 = vadd.f32 %v1441, %v1333
    %v1443 = vadd.f32 %v1442, %v1337
    %v1444 = vadd.f32 %v1443, %v1341
    %v1445 = vadd.f32 %v1444, %v1345
    %v1446 = vadd.f32 %v1445, %v1349
    %v1447 = vadd.f32 %v1446, %v1353
    %v1448 = vadd.f32 %v1230, %v1234
    %v1449 = vadd.f32 %v1448, %v1238
    %v1450 = vadd.f32 %v1449, %v1242
    %v1451 = vadd.f32 %v1450, %v1246
    %v1452 = vadd.f32 %v1451, %v1250
    %v1453 = vadd.f32 %v1452, %v1254
    %v1454 = vadd.f32 %v1453, %v1258
    %v1455 = vadd.f32 %v1454, %v1262
    %v1456 = vadd.f32 %v1455, %v1266
    %v1457 = vadd.f32 %v1456, %v1270
    %v1458 = vadd.f32 %v1457, %v1274
    %v1459 = vadd.f32 %v1458, %v1278
    %v1460 = vadd.f32 %v1459, %v1282
    %v1461 = vadd.f32 %v1460, %v1286
    %v1462 = vadd.f32 %v1461, %v1290
    %v1463 = vadd.f32 %v1462, %v1294
    %v1464 = vadd.f32 %v1463, %v1298
    %v1465 = vadd.f32 %v1464, %v1302
    %v1466 = vadd.f32 %v1465, %v1306
    %v1467 = vadd.f32 %v1466, %v1310
    %v1468 = vadd.f32 %v1467, %v1314
    %v1469 = vadd.f32 %v1468, %v1318
    %v1470 = vadd.f32 %v1469, %v1322
    %v1471 = vadd.f32 %v1470, %v1326
    %v1472 = vadd.f32 %v1471, %v1330
    %v1473 = vadd.f32 %v1472, %v1334
    %v1474 = vadd.f32 %v1473, %v1338
    %v1475 = vadd.f32 %v1474, %v1342
    %v1476 = vadd.f32 %v1475, %v1346
    %v1477 = vadd.f32 %v1476, %v1350
    %v1478 = vadd.f32 %v1477, %v1354
    %v1479 = vlaneseq
    %v1480 = vand.u32 %v1479, 127
    %vm1481 = vcmp.le.s32.totalorder %v1480, %v79
    %vm1482 = vcmp.le.s32.totalorder %v1480, %v80
    %vm1483 = vcmp.le.s32.totalorder %v1480, %v81
    %vm1484 = vcmp.le.s32.totalorder %v1480, %v82
    %v1485 = vsel %vm1481, 1, 0
    %v1486 = vsel %vm1482, 1, 0
    %v1487 = vsel %vm1483, 1, 0
    %v1488 = vsel %vm1484, 1, 0
    %v1489 = vcvt.s32.f32 %v1485
    %v1490 = vcvt.s32.f32 %v1486
    %v1491 = vcvt.s32.f32 %v1487
    %v1492 = vcvt.s32.f32 %v1488
    %vm1493 = vcmask 261120
    %v1495 = vsel %vm1493, %v1489, 0
    %v1498 = vsel %vm1493, %v1490, 0
    %v1501 = vsel %vm1493, %v1491, 0
    %v1504 = vsel %vm1493, %v1492, 0
    %1506 = vmatpush.msra.mxu0 0.0
    %1507 = vmatpush.msra.mxu0 0.0
    %1508 = vmatpush.msra.mxu0 0.0
    %1509 = vmatpush.msra.mxu0 0.0
    %1510 = vmatpush.msra.mxu0 0.0
    %1511 = vmatpush.msra.mxu0 0.0
    %1512 = vmatpush.msra.mxu0 0.0
    %1513 = vmatpush.msra.mxu0 0.0
    %1514 = vmatpush.msra.mxu0 0.0
    %1515 = vmatpush.msra.mxu0 0.0
    %1516 = vmatpush.msra.mxu0 0.0
    %1517 = vmatpush.msra.mxu0 0.0
    %v1518 = vand.u32 %v1478, 4294901760
    %1519 = vmatpush.msra.mxu0 %v1518
    %v1520 = vand.u32 %v1447, 4294901760
    %1521 = vmatpush.msra.mxu0 %v1520
    %v1522 = vand.u32 %v1416, 4294901760
    %1523 = vmatpush.msra.mxu0 %v1522
    %v1524 = vand.u32 %v1385, 4294901760
    %1525 = vmatpush.msra.mxu0 %v1524
    %v1526 = vand.u32 %v1495, 4294901760
    %v1527 = vsub.f32 %v1495, %v1526
    %v1528 = vand.u32 %v1527, 4294901760
    %v1529 = vsub.f32 %v1527, %v1528
    %v1530 = vand.u32 %v1529, 4294901760
    %1531 = vmatmul.f32.gmra.mxu0 %v1530
    %v1532 = vpop.f32.mrf.mxu0
    %v1533 = vadd.f32 0.0, %v1532
    %v1534 = vand.u32 %v1498, 4294901760
    %v1535 = vsub.f32 %v1498, %v1534
    %v1536 = vand.u32 %v1535, 4294901760
    %v1537 = vsub.f32 %v1535, %v1536
    %v1538 = vand.u32 %v1537, 4294901760
    %1539 = vmatmul.f32.gmra.mxu0 %v1538
    %v1540 = vpop.f32.mrf.mxu0
    %v1541 = vadd.f32 0.0, %v1540
    %v1542 = vand.u32 %v1501, 4294901760
    %v1543 = vsub.f32 %v1501, %v1542
    %v1544 = vand.u32 %v1543, 4294901760
    %v1545 = vsub.f32 %v1543, %v1544
    %v1546 = vand.u32 %v1545, 4294901760
    %1547 = vmatmul.f32.gmra.mxu0 %v1546
    %v1548 = vpop.f32.mrf.mxu0
    %v1549 = vadd.f32 0.0, %v1548
    %v1550 = vand.u32 %v1504, 4294901760
    %v1551 = vsub.f32 %v1504, %v1550
    %v1552 = vand.u32 %v1551, 4294901760
    %v1553 = vsub.f32 %v1551, %v1552
    %v1554 = vand.u32 %v1553, 4294901760
    %1555 = vmatmul.f32.gmra.mxu0 %v1554
    %v1556 = vpop.f32.mrf.mxu0
    %v1557 = vadd.f32 0.0, %v1556
    %1558 = vdwg.mxu0
    %1559 = vmatpush.msra.mxu0 0.0
    %1560 = vmatpush.msra.mxu0 0.0
    %1561 = vmatpush.msra.mxu0 0.0
    %1562 = vmatpush.msra.mxu0 0.0
    %1563 = vmatpush.msra.mxu0 0.0
    %1564 = vmatpush.msra.mxu0 0.0
    %1565 = vmatpush.msra.mxu0 0.0
    %1566 = vmatpush.msra.mxu0 0.0
    %1567 = vmatpush.msra.mxu0 0.0
    %1568 = vmatpush.msra.mxu0 0.0
    %1569 = vmatpush.msra.mxu0 0.0
    %1570 = vmatpush.msra.mxu0 0.0
    %v1571 = vand.u32 %v1478, 4294901760
    %v1572 = vsub.f32 %v1478, %v1571
    %v1573 = vand.u32 %v1572, 4294901760
    %v1574 = vsub.f32 %v1572, %v1573
    %v1575 = vand.u32 %v1574, 4294901760
    %1576 = vmatpush.msra.mxu0 %v1575
    %v1577 = vand.u32 %v1447, 4294901760
    %v1578 = vsub.f32 %v1447, %v1577
    %v1579 = vand.u32 %v1578, 4294901760
    %v1580 = vsub.f32 %v1578, %v1579
    %v1581 = vand.u32 %v1580, 4294901760
    %1582 = vmatpush.msra.mxu0 %v1581
    %v1583 = vand.u32 %v1416, 4294901760
    %v1584 = vsub.f32 %v1416, %v1583
    %v1585 = vand.u32 %v1584, 4294901760
    %v1586 = vsub.f32 %v1584, %v1585
    %v1587 = vand.u32 %v1586, 4294901760
    %1588 = vmatpush.msra.mxu0 %v1587
    %v1589 = vand.u32 %v1385, 4294901760
    %v1590 = vsub.f32 %v1385, %v1589
    %v1591 = vand.u32 %v1590, 4294901760
    %v1592 = vsub.f32 %v1590, %v1591
    %v1593 = vand.u32 %v1592, 4294901760
    %1594 = vmatpush.msra.mxu0 %v1593
    %v1595 = vand.u32 %v1495, 4294901760
    %1596 = vmatmul.f32.gmra.mxu0 %v1595
    %v1597 = vpop.f32.mrf.mxu0
    %v1598 = vadd.f32 %v1533, %v1597
    %v1599 = vand.u32 %v1498, 4294901760
    %1600 = vmatmul.f32.gmra.mxu0 %v1599
    %v1601 = vpop.f32.mrf.mxu0
    %v1602 = vadd.f32 %v1541, %v1601
    %v1603 = vand.u32 %v1501, 4294901760
    %1604 = vmatmul.f32.gmra.mxu0 %v1603
    %v1605 = vpop.f32.mrf.mxu0
    %v1606 = vadd.f32 %v1549, %v1605
    %v1607 = vand.u32 %v1504, 4294901760
    %1608 = vmatmul.f32.gmra.mxu0 %v1607
    %v1609 = vpop.f32.mrf.mxu0
    %v1610 = vadd.f32 %v1557, %v1609
    %1611 = vdwg.mxu0
    %1612 = vmatpush.msra.mxu0 0.0
    %1613 = vmatpush.msra.mxu0 0.0
    %1614 = vmatpush.msra.mxu0 0.0
    %1615 = vmatpush.msra.mxu0 0.0
    %1616 = vmatpush.msra.mxu0 0.0
    %1617 = vmatpush.msra.mxu0 0.0
    %1618 = vmatpush.msra.mxu0 0.0
    %1619 = vmatpush.msra.mxu0 0.0
    %1620 = vmatpush.msra.mxu0 0.0
    %1621 = vmatpush.msra.mxu0 0.0
    %1622 = vmatpush.msra.mxu0 0.0
    %1623 = vmatpush.msra.mxu0 0.0
    %v1624 = vand.u32 %v1478, 4294901760
    %v1625 = vsub.f32 %v1478, %v1624
    %1626 = vmatpush.msra.mxu0 %v1625
    %v1627 = vand.u32 %v1447, 4294901760
    %v1628 = vsub.f32 %v1447, %v1627
    %1629 = vmatpush.msra.mxu0 %v1628
    %v1630 = vand.u32 %v1416, 4294901760
    %v1631 = vsub.f32 %v1416, %v1630
    %1632 = vmatpush.msra.mxu0 %v1631
    %v1633 = vand.u32 %v1385, 4294901760
    %v1634 = vsub.f32 %v1385, %v1633
    %1635 = vmatpush.msra.mxu0 %v1634
    %v1636 = vand.u32 %v1495, 4294901760
    %v1637 = vsub.f32 %v1495, %v1636
    %1638 = vmatmul.f32.gmra.mxu0 %v1637
    %v1639 = vpop.f32.mrf.mxu0
    %v1640 = vadd.f32 %v1598, %v1639
    %v1641 = vand.u32 %v1498, 4294901760
    %v1642 = vsub.f32 %v1498, %v1641
    %1643 = vmatmul.f32.gmra.mxu0 %v1642
    %v1644 = vpop.f32.mrf.mxu0
    %v1645 = vadd.f32 %v1602, %v1644
    %v1646 = vand.u32 %v1501, 4294901760
    %v1647 = vsub.f32 %v1501, %v1646
    %1648 = vmatmul.f32.gmra.mxu0 %v1647
    %v1649 = vpop.f32.mrf.mxu0
    %v1650 = vadd.f32 %v1606, %v1649
    %v1651 = vand.u32 %v1504, 4294901760
    %v1652 = vsub.f32 %v1504, %v1651
    %1653 = vmatmul.f32.gmra.mxu0 %v1652
    %v1654 = vpop.f32.mrf.mxu0
    %v1655 = vadd.f32 %v1610, %v1654
    %1656 = vdwg.mxu0
    %1657 = vmatpush.msra.mxu0 0.0
    %1658 = vmatpush.msra.mxu0 0.0
    %1659 = vmatpush.msra.mxu0 0.0
    %1660 = vmatpush.msra.mxu0 0.0
    %1661 = vmatpush.msra.mxu0 0.0
    %1662 = vmatpush.msra.mxu0 0.0
    %1663 = vmatpush.msra.mxu0 0.0
    %1664 = vmatpush.msra.mxu0 0.0
    %1665 = vmatpush.msra.mxu0 0.0
    %1666 = vmatpush.msra.mxu0 0.0
    %1667 = vmatpush.msra.mxu0 0.0
    %1668 = vmatpush.msra.mxu0 0.0
    %v1669 = vand.u32 %v1478, 4294901760
    %1670 = vmatpush.msra.mxu0 %v1669
    %v1671 = vand.u32 %v1447, 4294901760
    %1672 = vmatpush.msra.mxu0 %v1671
    %v1673 = vand.u32 %v1416, 4294901760
    %1674 = vmatpush.msra.mxu0 %v1673
    %v1675 = vand.u32 %v1385, 4294901760
    %1676 = vmatpush.msra.mxu0 %v1675
    %v1677 = vand.u32 %v1495, 4294901760
    %v1678 = vsub.f32 %v1495, %v1677
    %v1679 = vand.u32 %v1678, 4294901760
    %1680 = vmatmul.f32.gmra.mxu0 %v1679
    %v1681 = vpop.f32.mrf.mxu0
    %v1682 = vadd.f32 %v1640, %v1681
    %v1683 = vand.u32 %v1498, 4294901760
    %v1684 = vsub.f32 %v1498, %v1683
    %v1685 = vand.u32 %v1684, 4294901760
    %1686 = vmatmul.f32.gmra.mxu0 %v1685
    %v1687 = vpop.f32.mrf.mxu0
    %v1688 = vadd.f32 %v1645, %v1687
    %v1689 = vand.u32 %v1501, 4294901760
    %v1690 = vsub.f32 %v1501, %v1689
    %v1691 = vand.u32 %v1690, 4294901760
    %1692 = vmatmul.f32.gmra.mxu0 %v1691
    %v1693 = vpop.f32.mrf.mxu0
    %v1694 = vadd.f32 %v1650, %v1693
    %v1695 = vand.u32 %v1504, 4294901760
    %v1696 = vsub.f32 %v1504, %v1695
    %v1697 = vand.u32 %v1696, 4294901760
    %1698 = vmatmul.f32.gmra.mxu0 %v1697
    %v1699 = vpop.f32.mrf.mxu0
    %v1700 = vadd.f32 %v1655, %v1699
    %1701 = vdwg.mxu0
    %1702 = vmatpush.msra.mxu0 0.0
    %1703 = vmatpush.msra.mxu0 0.0
    %1704 = vmatpush.msra.mxu0 0.0
    %1705 = vmatpush.msra.mxu0 0.0
    %1706 = vmatpush.msra.mxu0 0.0
    %1707 = vmatpush.msra.mxu0 0.0
    %1708 = vmatpush.msra.mxu0 0.0
    %1709 = vmatpush.msra.mxu0 0.0
    %1710 = vmatpush.msra.mxu0 0.0
    %1711 = vmatpush.msra.mxu0 0.0
    %1712 = vmatpush.msra.mxu0 0.0
    %1713 = vmatpush.msra.mxu0 0.0
    %v1714 = vand.u32 %v1478, 4294901760
    %v1715 = vsub.f32 %v1478, %v1714
    %v1716 = vand.u32 %v1715, 4294901760
    %1717 = vmatpush.msra.mxu0 %v1716
    %v1718 = vand.u32 %v1447, 4294901760
    %v1719 = vsub.f32 %v1447, %v1718
    %v1720 = vand.u32 %v1719, 4294901760
    %1721 = vmatpush.msra.mxu0 %v1720
    %v1722 = vand.u32 %v1416, 4294901760
    %v1723 = vsub.f32 %v1416, %v1722
    %v1724 = vand.u32 %v1723, 4294901760
    %1725 = vmatpush.msra.mxu0 %v1724
    %v1726 = vand.u32 %v1385, 4294901760
    %v1727 = vsub.f32 %v1385, %v1726
    %v1728 = vand.u32 %v1727, 4294901760
    %1729 = vmatpush.msra.mxu0 %v1728
    %v1730 = vand.u32 %v1495, 4294901760
    %1731 = vmatmul.f32.gmra.mxu0 %v1730
    %v1732 = vpop.f32.mrf.mxu0
    %v1733 = vadd.f32 %v1682, %v1732
    %v1734 = vand.u32 %v1498, 4294901760
    %1735 = vmatmul.f32.gmra.mxu0 %v1734
    %v1736 = vpop.f32.mrf.mxu0
    %v1737 = vadd.f32 %v1688, %v1736
    %v1738 = vand.u32 %v1501, 4294901760
    %1739 = vmatmul.f32.gmra.mxu0 %v1738
    %v1740 = vpop.f32.mrf.mxu0
    %v1741 = vadd.f32 %v1694, %v1740
    %v1742 = vand.u32 %v1504, 4294901760
    %1743 = vmatmul.f32.gmra.mxu0 %v1742
    %v1744 = vpop.f32.mrf.mxu0
    %v1745 = vadd.f32 %v1700, %v1744
    %1746 = vdwg.mxu0
    %1747 = vmatpush.msra.mxu0 0.0
    %1748 = vmatpush.msra.mxu0 0.0
    %1749 = vmatpush.msra.mxu0 0.0
    %1750 = vmatpush.msra.mxu0 0.0
    %1751 = vmatpush.msra.mxu0 0.0
    %1752 = vmatpush.msra.mxu0 0.0
    %1753 = vmatpush.msra.mxu0 0.0
    %1754 = vmatpush.msra.mxu0 0.0
    %1755 = vmatpush.msra.mxu0 0.0
    %1756 = vmatpush.msra.mxu0 0.0
    %1757 = vmatpush.msra.mxu0 0.0
    %1758 = vmatpush.msra.mxu0 0.0
    %v1759 = vand.u32 %v1478, 4294901760
    %1760 = vmatpush.msra.mxu0 %v1759
    %v1761 = vand.u32 %v1447, 4294901760
    %1762 = vmatpush.msra.mxu0 %v1761
    %v1763 = vand.u32 %v1416, 4294901760
    %1764 = vmatpush.msra.mxu0 %v1763
    %v1765 = vand.u32 %v1385, 4294901760
    %1766 = vmatpush.msra.mxu0 %v1765
    %v1767 = vand.u32 %v1495, 4294901760
    %1768 = vmatmul.f32.gmra.mxu0 %v1767
    %v1769 = vpop.f32.mrf.mxu0
    %v1770 = vadd.f32 %v1733, %v1769
    %v1771 = vand.u32 %v1498, 4294901760
    %1772 = vmatmul.f32.gmra.mxu0 %v1771
    %v1773 = vpop.f32.mrf.mxu0
    %v1774 = vadd.f32 %v1737, %v1773
    %v1775 = vand.u32 %v1501, 4294901760
    %1776 = vmatmul.f32.gmra.mxu0 %v1775
    %v1777 = vpop.f32.mrf.mxu0
    %v1778 = vadd.f32 %v1741, %v1777
    %v1779 = vand.u32 %v1504, 4294901760
    %1780 = vmatmul.f32.gmra.mxu0 %v1779
    %v1781 = vpop.f32.mrf.mxu0
    %v1782 = vadd.f32 %v1745, %v1781
    %1783 = vdwg.mxu0
    %v1784 = vmul.f32 %v1385, %v1385
    %v1785 = vmul.f32 %v1416, %v1416
    %v1786 = vmul.f32 %v1447, %v1447
    %v1787 = vmul.f32 %v1478, %v1478
    %1788 = vmatpush.msra.mxu0 0.0
    %1789 = vmatpush.msra.mxu0 0.0
    %1790 = vmatpush.msra.mxu0 0.0
    %1791 = vmatpush.msra.mxu0 0.0
    %1792 = vmatpush.msra.mxu0 0.0
    %1793 = vmatpush.msra.mxu0 0.0
    %1794 = vmatpush.msra.mxu0 0.0
    %1795 = vmatpush.msra.mxu0 0.0
    %1796 = vmatpush.msra.mxu0 0.0
    %1797 = vmatpush.msra.mxu0 0.0
    %1798 = vmatpush.msra.mxu0 0.0
    %1799 = vmatpush.msra.mxu0 0.0
    %v1800 = vand.u32 %v1787, 4294901760
    %1801 = vmatpush.msra.mxu0 %v1800
    %v1802 = vand.u32 %v1786, 4294901760
    %1803 = vmatpush.msra.mxu0 %v1802
    %v1804 = vand.u32 %v1785, 4294901760
    %1805 = vmatpush.msra.mxu0 %v1804
    %v1806 = vand.u32 %v1784, 4294901760
    %1807 = vmatpush.msra.mxu0 %v1806
    %v1808 = vand.u32 %v1495, 4294901760
    %v1809 = vsub.f32 %v1495, %v1808
    %v1810 = vand.u32 %v1809, 4294901760
    %v1811 = vsub.f32 %v1809, %v1810
    %v1812 = vand.u32 %v1811, 4294901760
    %1813 = vmatmul.f32.gmra.mxu0 %v1812
    %v1814 = vpop.f32.mrf.mxu0
    %v1815 = vadd.f32 0.0, %v1814
    %v1816 = vand.u32 %v1498, 4294901760
    %v1817 = vsub.f32 %v1498, %v1816
    %v1818 = vand.u32 %v1817, 4294901760
    %v1819 = vsub.f32 %v1817, %v1818
    %v1820 = vand.u32 %v1819, 4294901760
    %1821 = vmatmul.f32.gmra.mxu0 %v1820
    %v1822 = vpop.f32.mrf.mxu0
    %v1823 = vadd.f32 0.0, %v1822
    %v1824 = vand.u32 %v1501, 4294901760
    %v1825 = vsub.f32 %v1501, %v1824
    %v1826 = vand.u32 %v1825, 4294901760
    %v1827 = vsub.f32 %v1825, %v1826
    %v1828 = vand.u32 %v1827, 4294901760
    %1829 = vmatmul.f32.gmra.mxu0 %v1828
    %v1830 = vpop.f32.mrf.mxu0
    %v1831 = vadd.f32 0.0, %v1830
    %v1832 = vand.u32 %v1504, 4294901760
    %v1833 = vsub.f32 %v1504, %v1832
    %v1834 = vand.u32 %v1833, 4294901760
    %v1835 = vsub.f32 %v1833, %v1834
    %v1836 = vand.u32 %v1835, 4294901760
    %1837 = vmatmul.f32.gmra.mxu0 %v1836
    %v1838 = vpop.f32.mrf.mxu0
    %v1839 = vadd.f32 0.0, %v1838
    %1840 = vdwg.mxu0
    %1841 = vmatpush.msra.mxu0 0.0
    %1842 = vmatpush.msra.mxu0 0.0
    %1843 = vmatpush.msra.mxu0 0.0
    %1844 = vmatpush.msra.mxu0 0.0
    %1845 = vmatpush.msra.mxu0 0.0
    %1846 = vmatpush.msra.mxu0 0.0
    %1847 = vmatpush.msra.mxu0 0.0
    %1848 = vmatpush.msra.mxu0 0.0
    %1849 = vmatpush.msra.mxu0 0.0
    %1850 = vmatpush.msra.mxu0 0.0
    %1851 = vmatpush.msra.mxu0 0.0
    %1852 = vmatpush.msra.mxu0 0.0
    %v1853 = vand.u32 %v1787, 4294901760
    %v1854 = vsub.f32 %v1787, %v1853
    %v1855 = vand.u32 %v1854, 4294901760
    %v1856 = vsub.f32 %v1854, %v1855
    %v1857 = vand.u32 %v1856, 4294901760
    %1858 = vmatpush.msra.mxu0 %v1857
    %v1859 = vand.u32 %v1786, 4294901760
    %v1860 = vsub.f32 %v1786, %v1859
    %v1861 = vand.u32 %v1860, 4294901760
    %v1862 = vsub.f32 %v1860, %v1861
    %v1863 = vand.u32 %v1862, 4294901760
    %1864 = vmatpush.msra.mxu0 %v1863
    %v1865 = vand.u32 %v1785, 4294901760
    %v1866 = vsub.f32 %v1785, %v1865
    %v1867 = vand.u32 %v1866, 4294901760
    %v1868 = vsub.f32 %v1866, %v1867
    %v1869 = vand.u32 %v1868, 4294901760
    %1870 = vmatpush.msra.mxu0 %v1869
    %v1871 = vand.u32 %v1784, 4294901760
    %v1872 = vsub.f32 %v1784, %v1871
    %v1873 = vand.u32 %v1872, 4294901760
    %v1874 = vsub.f32 %v1872, %v1873
    %v1875 = vand.u32 %v1874, 4294901760
    %1876 = vmatpush.msra.mxu0 %v1875
    %v1877 = vand.u32 %v1495, 4294901760
    %1878 = vmatmul.f32.gmra.mxu0 %v1877
    %v1879 = vpop.f32.mrf.mxu0
    %v1880 = vadd.f32 %v1815, %v1879
    %v1881 = vand.u32 %v1498, 4294901760
    %1882 = vmatmul.f32.gmra.mxu0 %v1881
    %v1883 = vpop.f32.mrf.mxu0
    %v1884 = vadd.f32 %v1823, %v1883
    %v1885 = vand.u32 %v1501, 4294901760
    %1886 = vmatmul.f32.gmra.mxu0 %v1885
    %v1887 = vpop.f32.mrf.mxu0
    %v1888 = vadd.f32 %v1831, %v1887
    %v1889 = vand.u32 %v1504, 4294901760
    %1890 = vmatmul.f32.gmra.mxu0 %v1889
    %v1891 = vpop.f32.mrf.mxu0
    %v1892 = vadd.f32 %v1839, %v1891
    %1893 = vdwg.mxu0
    %1894 = vmatpush.msra.mxu0 0.0
    %1895 = vmatpush.msra.mxu0 0.0
    %1896 = vmatpush.msra.mxu0 0.0
    %1897 = vmatpush.msra.mxu0 0.0
    %1898 = vmatpush.msra.mxu0 0.0
    %1899 = vmatpush.msra.mxu0 0.0
    %1900 = vmatpush.msra.mxu0 0.0
    %1901 = vmatpush.msra.mxu0 0.0
    %1902 = vmatpush.msra.mxu0 0.0
    %1903 = vmatpush.msra.mxu0 0.0
    %1904 = vmatpush.msra.mxu0 0.0
    %1905 = vmatpush.msra.mxu0 0.0
    %v1906 = vand.u32 %v1787, 4294901760
    %v1907 = vsub.f32 %v1787, %v1906
    %1908 = vmatpush.msra.mxu0 %v1907
    %v1909 = vand.u32 %v1786, 4294901760
    %v1910 = vsub.f32 %v1786, %v1909
    %1911 = vmatpush.msra.mxu0 %v1910
    %v1912 = vand.u32 %v1785, 4294901760
    %v1913 = vsub.f32 %v1785, %v1912
    %1914 = vmatpush.msra.mxu0 %v1913
    %v1915 = vand.u32 %v1784, 4294901760
    %v1916 = vsub.f32 %v1784, %v1915
    %1917 = vmatpush.msra.mxu0 %v1916
    %v1918 = vand.u32 %v1495, 4294901760
    %v1919 = vsub.f32 %v1495, %v1918
    %1920 = vmatmul.f32.gmra.mxu0 %v1919
    %v1921 = vpop.f32.mrf.mxu0
    %v1922 = vadd.f32 %v1880, %v1921
    %v1923 = vand.u32 %v1498, 4294901760
    %v1924 = vsub.f32 %v1498, %v1923
    %1925 = vmatmul.f32.gmra.mxu0 %v1924
    %v1926 = vpop.f32.mrf.mxu0
    %v1927 = vadd.f32 %v1884, %v1926
    %v1928 = vand.u32 %v1501, 4294901760
    %v1929 = vsub.f32 %v1501, %v1928
    %1930 = vmatmul.f32.gmra.mxu0 %v1929
    %v1931 = vpop.f32.mrf.mxu0
    %v1932 = vadd.f32 %v1888, %v1931
    %v1933 = vand.u32 %v1504, 4294901760
    %v1934 = vsub.f32 %v1504, %v1933
    %1935 = vmatmul.f32.gmra.mxu0 %v1934
    %v1936 = vpop.f32.mrf.mxu0
    %v1937 = vadd.f32 %v1892, %v1936
    %1938 = vdwg.mxu0
    %1939 = vmatpush.msra.mxu0 0.0
    %1940 = vmatpush.msra.mxu0 0.0
    %1941 = vmatpush.msra.mxu0 0.0
    %1942 = vmatpush.msra.mxu0 0.0
    %1943 = vmatpush.msra.mxu0 0.0
    %1944 = vmatpush.msra.mxu0 0.0
    %1945 = vmatpush.msra.mxu0 0.0
    %1946 = vmatpush.msra.mxu0 0.0
    %1947 = vmatpush.msra.mxu0 0.0
    %1948 = vmatpush.msra.mxu0 0.0
    %1949 = vmatpush.msra.mxu0 0.0
    %1950 = vmatpush.msra.mxu0 0.0
    %v1951 = vand.u32 %v1787, 4294901760
    %1952 = vmatpush.msra.mxu0 %v1951
    %v1953 = vand.u32 %v1786, 4294901760
    %1954 = vmatpush.msra.mxu0 %v1953
    %v1955 = vand.u32 %v1785, 4294901760
    %1956 = vmatpush.msra.mxu0 %v1955
    %v1957 = vand.u32 %v1784, 4294901760
    %1958 = vmatpush.msra.mxu0 %v1957
    %v1959 = vand.u32 %v1495, 4294901760
    %v1960 = vsub.f32 %v1495, %v1959
    %v1961 = vand.u32 %v1960, 4294901760
    %1962 = vmatmul.f32.gmra.mxu0 %v1961
    %v1963 = vpop.f32.mrf.mxu0
    %v1964 = vadd.f32 %v1922, %v1963
    %v1965 = vand.u32 %v1498, 4294901760
    %v1966 = vsub.f32 %v1498, %v1965
    %v1967 = vand.u32 %v1966, 4294901760
    %1968 = vmatmul.f32.gmra.mxu0 %v1967
    %v1969 = vpop.f32.mrf.mxu0
    %v1970 = vadd.f32 %v1927, %v1969
    %v1971 = vand.u32 %v1501, 4294901760
    %v1972 = vsub.f32 %v1501, %v1971
    %v1973 = vand.u32 %v1972, 4294901760
    %1974 = vmatmul.f32.gmra.mxu0 %v1973
    %v1975 = vpop.f32.mrf.mxu0
    %v1976 = vadd.f32 %v1932, %v1975
    %v1977 = vand.u32 %v1504, 4294901760
    %v1978 = vsub.f32 %v1504, %v1977
    %v1979 = vand.u32 %v1978, 4294901760
    %1980 = vmatmul.f32.gmra.mxu0 %v1979
    %v1981 = vpop.f32.mrf.mxu0
    %v1982 = vadd.f32 %v1937, %v1981
    %1983 = vdwg.mxu0
    %1984 = vmatpush.msra.mxu0 0.0
    %1985 = vmatpush.msra.mxu0 0.0
    %1986 = vmatpush.msra.mxu0 0.0
    %1987 = vmatpush.msra.mxu0 0.0
    %1988 = vmatpush.msra.mxu0 0.0
    %1989 = vmatpush.msra.mxu0 0.0
    %1990 = vmatpush.msra.mxu0 0.0
    %1991 = vmatpush.msra.mxu0 0.0
    %1992 = vmatpush.msra.mxu0 0.0
    %1993 = vmatpush.msra.mxu0 0.0
    %1994 = vmatpush.msra.mxu0 0.0
    %1995 = vmatpush.msra.mxu0 0.0
    %v1996 = vand.u32 %v1787, 4294901760
    %v1997 = vsub.f32 %v1787, %v1996
    %v1998 = vand.u32 %v1997, 4294901760
    %1999 = vmatpush.msra.mxu0 %v1998
    %v2000 = vand.u32 %v1786, 4294901760
    %v2001 = vsub.f32 %v1786, %v2000
    %v2002 = vand.u32 %v2001, 4294901760
    %2003 = vmatpush.msra.mxu0 %v2002
    %v2004 = vand.u32 %v1785, 4294901760
    %v2005 = vsub.f32 %v1785, %v2004
    %v2006 = vand.u32 %v2005, 4294901760
    %2007 = vmatpush.msra.mxu0 %v2006
    %v2008 = vand.u32 %v1784, 4294901760
    %v2009 = vsub.f32 %v1784, %v2008
    %v2010 = vand.u32 %v2009, 4294901760
    %2011 = vmatpush.msra.mxu0 %v2010
    %v2012 = vand.u32 %v1495, 4294901760
    %2013 = vmatmul.f32.gmra.mxu0 %v2012
    %v2014 = vpop.f32.mrf.mxu0
    %v2015 = vadd.f32 %v1964, %v2014
    %v2016 = vand.u32 %v1498, 4294901760
    %2017 = vmatmul.f32.gmra.mxu0 %v2016
    %v2018 = vpop.f32.mrf.mxu0
    %v2019 = vadd.f32 %v1970, %v2018
    %v2020 = vand.u32 %v1501, 4294901760
    %2021 = vmatmul.f32.gmra.mxu0 %v2020
    %v2022 = vpop.f32.mrf.mxu0
    %v2023 = vadd.f32 %v1976, %v2022
    %v2024 = vand.u32 %v1504, 4294901760
    %2025 = vmatmul.f32.gmra.mxu0 %v2024
    %v2026 = vpop.f32.mrf.mxu0
    %v2027 = vadd.f32 %v1982, %v2026
    %2028 = vdwg.mxu0
    %2029 = vmatpush.msra.mxu0 0.0
    %2030 = vmatpush.msra.mxu0 0.0
    %2031 = vmatpush.msra.mxu0 0.0
    %2032 = vmatpush.msra.mxu0 0.0
    %2033 = vmatpush.msra.mxu0 0.0
    %2034 = vmatpush.msra.mxu0 0.0
    %2035 = vmatpush.msra.mxu0 0.0
    %2036 = vmatpush.msra.mxu0 0.0
    %2037 = vmatpush.msra.mxu0 0.0
    %2038 = vmatpush.msra.mxu0 0.0
    %2039 = vmatpush.msra.mxu0 0.0
    %2040 = vmatpush.msra.mxu0 0.0
    %v2041 = vand.u32 %v1787, 4294901760
    %2042 = vmatpush.msra.mxu0 %v2041
    %v2043 = vand.u32 %v1786, 4294901760
    %2044 = vmatpush.msra.mxu0 %v2043
    %v2045 = vand.u32 %v1785, 4294901760
    %2046 = vmatpush.msra.mxu0 %v2045
    %v2047 = vand.u32 %v1784, 4294901760
    %2048 = vmatpush.msra.mxu0 %v2047
    %v2049 = vand.u32 %v1495, 4294901760
    %2050 = vmatmul.f32.gmra.mxu0 %v2049
    %v2051 = vpop.f32.mrf.mxu0
    %v2052 = vadd.f32 %v2015, %v2051
    %v2053 = vand.u32 %v1498, 4294901760
    %2054 = vmatmul.f32.gmra.mxu0 %v2053
    %v2055 = vpop.f32.mrf.mxu0
    %v2056 = vadd.f32 %v2019, %v2055
    %v2057 = vand.u32 %v1501, 4294901760
    %2058 = vmatmul.f32.gmra.mxu0 %v2057
    %v2059 = vpop.f32.mrf.mxu0
    %v2060 = vadd.f32 %v2023, %v2059
    %v2061 = vand.u32 %v1504, 4294901760
    %2062 = vmatmul.f32.gmra.mxu0 %v2061
    %v2063 = vpop.f32.mrf.mxu0
    %v2064 = vadd.f32 %v2027, %v2063
    %2065 = vdwg.mxu0
    %v2066 = vadd.s32 %v79, 1
    %v2067 = vadd.s32 %v80, 1
    %v2068 = vadd.s32 %v81, 1
    %v2069 = vadd.s32 %v82, 1
    %v2070 = vcvt.s32.f32 %v2066
    %v2071 = vcvt.s32.f32 %v2067
    %v2072 = vcvt.s32.f32 %v2068
    %v2073 = vcvt.s32.f32 %v2069
    %v2074 = vrcp.pop %v2070
    %v2075 = vmul.f32 %v2070, %v2074
    %v2076 = vsub.f32 1.0, %v2075
    %v2077 = vmul.f32 %v2074, %v2076
    %v2078 = vadd.f32 %v2074, %v2077
    %vm2079 = vweird.f32 %v2070
    %vm2080 = vweird.f32 %v2074
    %vm2081 = vmor %vm2079, %vm2080
    %v2082 = vsel %vm2081, %v2074, %v2078
    %v2083 = vand.u32 2147483647, %v2070
    %vm2084 = vcmp.eq.f32.partialorder %v2083, 8.507059e+37
    %v2085 = vand.u32 %v2070, 2147483648
    %v2086 = vor.u32 1.1754944e-38, %v2085
    %v2087 = vsel %vm2084, %v2086, %v2082
    %v2088 = vmul.f32 1.0, %v2087
    %v2089 = vrcp.pop %v2071
    %v2090 = vmul.f32 %v2071, %v2089
    %v2091 = vsub.f32 1.0, %v2090
    %v2092 = vmul.f32 %v2089, %v2091
    %v2093 = vadd.f32 %v2089, %v2092
    %vm2094 = vweird.f32 %v2071
    %vm2095 = vweird.f32 %v2089
    %vm2096 = vmor %vm2094, %vm2095
    %v2097 = vsel %vm2096, %v2089, %v2093
    %v2098 = vand.u32 2147483647, %v2071
    %vm2099 = vcmp.eq.f32.partialorder %v2098, 8.507059e+37
    %v2100 = vand.u32 %v2071, 2147483648
    %v2101 = vor.u32 1.1754944e-38, %v2100
    %v2102 = vsel %vm2099, %v2101, %v2097
    %v2103 = vmul.f32 1.0, %v2102
    %v2104 = vrcp.pop %v2072
    %v2105 = vmul.f32 %v2072, %v2104
    %v2106 = vsub.f32 1.0, %v2105
    %v2107 = vmul.f32 %v2104, %v2106
    %v2108 = vadd.f32 %v2104, %v2107
    %vm2109 = vweird.f32 %v2072
    %vm2110 = vweird.f32 %v2104
    %vm2111 = vmor %vm2109, %vm2110
    %v2112 = vsel %vm2111, %v2104, %v2108
    %v2113 = vand.u32 2147483647, %v2072
    %vm2114 = vcmp.eq.f32.partialorder %v2113, 8.507059e+37
    %v2115 = vand.u32 %v2072, 2147483648
    %v2116 = vor.u32 1.1754944e-38, %v2115
    %v2117 = vsel %vm2114, %v2116, %v2112
    %v2118 = vmul.f32 1.0, %v2117
    %v2119 = vrcp.pop %v2073
    %v2120 = vmul.f32 %v2073, %v2119
    %v2121 = vsub.f32 1.0, %v2120
    %v2122 = vmul.f32 %v2119, %v2121
    %v2123 = vadd.f32 %v2119, %v2122
    %vm2124 = vweird.f32 %v2073
    %vm2125 = vweird.f32 %v2119
    %vm2126 = vmor %vm2124, %vm2125
    %v2127 = vsel %vm2126, %v2119, %v2123
    %v2128 = vand.u32 2147483647, %v2073
    %vm2129 = vcmp.eq.f32.partialorder %v2128, 8.507059e+37
    %v2130 = vand.u32 %v2073, 2147483648
    %v2131 = vor.u32 1.1754944e-38, %v2130
    %v2132 = vsel %vm2129, %v2131, %v2127
    %v2133 = vmul.f32 1.0, %v2132
    %v2134 = vmul.f32 %v1770, %v2088
    %v2135 = vmul.f32 %v1774, %v2103
    %v2136 = vmul.f32 %v1778, %v2118
    %v2137 = vmul.f32 %v1782, %v2133
    %v2138 = vmul.f32 %v2052, %v2088
    %v2139 = vmul.f32 %v2056, %v2103
    %v2140 = vmul.f32 %v2060, %v2118
    %v2141 = vmul.f32 %v2064, %v2133
    %v2142 = vmul.f32 %v2134, %v2134
    %v2143 = vmul.f32 %v2135, %v2135
    %v2144 = vmul.f32 %v2136, %v2136
    %v2145 = vmul.f32 %v2137, %v2137
    %v2146 = vsub.f32 %v2138, %v2142
    %v2147 = vsub.f32 %v2139, %v2143
    %v2148 = vsub.f32 %v2140, %v2144
    %v2149 = vsub.f32 %v2141, %v2145
    %v2150 = vmul.f32 %v2070, %v2146
    %v2151 = vmul.f32 %v2071, %v2147
    %v2152 = vmul.f32 %v2072, %v2148
    %v2153 = vmul.f32 %v2073, %v2149
    %v2154 = vsub.f32 1.0, %v2150
    %v2155 = vsub.f32 1.0, %v2151
    %v2156 = vsub.f32 1.0, %v2152
    %v2157 = vsub.f32 1.0, %v2153
    %v2158 = vmul.f32 %v2154, %v2088
    %v2159 = vmul.f32 %v2155, %v2103
    %v2160 = vmul.f32 %v2156, %v2118
    %v2161 = vmul.f32 %v2157, %v2133
    %v2162 = vmax.f32 %v2158, 0.0
    %v2163 = vmax.f32 %v2159, 0.0
    %v2164 = vmax.f32 %v2160, 0.0
    %v2165 = vmax.f32 %v2161, 0.0
    %v2166 = vrsqrt.pop %v2162
    %v2167 = vmul.f32 %v2166, %v2162
    %v2168 = vmul.f32 %v2167, %v2166
    %v2169 = vmul.f32 0.5, %v2168
    %v2170 = vsub.f32 1.5, %v2169
    %v2171 = vmul.f32 %v2166, %v2170
    %v2172 = vmul.f32 %v2162, %v2171
    %vm2173 = vcmp.eq.f32.partialorder %v2162, inf
    %v2174 = vsel %vm2173, %v2162, %v2172
    %vm2175 = vcmp.eq.f32.partialorder %v2162, 0.0
    %v2176 = vand.u32 %v2162, 2147483648
    %v2177 = vsel %vm2175, %v2176, %v2174
    %v2178 = vrsqrt.pop %v2163
    %v2179 = vmul.f32 %v2178, %v2163
    %v2180 = vmul.f32 %v2179, %v2178
    %v2181 = vmul.f32 0.5, %v2180
    %v2182 = vsub.f32 1.5, %v2181
    %v2183 = vmul.f32 %v2178, %v2182
    %v2184 = vmul.f32 %v2163, %v2183
    %vm2185 = vcmp.eq.f32.partialorder %v2163, inf
    %v2186 = vsel %vm2185, %v2163, %v2184
    %vm2187 = vcmp.eq.f32.partialorder %v2163, 0.0
    %v2188 = vand.u32 %v2163, 2147483648
    %v2189 = vsel %vm2187, %v2188, %v2186
    %v2190 = vrsqrt.pop %v2164
    %v2191 = vmul.f32 %v2190, %v2164
    %v2192 = vmul.f32 %v2191, %v2190
    %v2193 = vmul.f32 0.5, %v2192
    %v2194 = vsub.f32 1.5, %v2193
    %v2195 = vmul.f32 %v2190, %v2194
    %v2196 = vmul.f32 %v2164, %v2195
    %vm2197 = vcmp.eq.f32.partialorder %v2164, inf
    %v2198 = vsel %vm2197, %v2164, %v2196
    %vm2199 = vcmp.eq.f32.partialorder %v2164, 0.0
    %v2200 = vand.u32 %v2164, 2147483648
    %v2201 = vsel %vm2199, %v2200, %v2198
    %v2202 = vrsqrt.pop %v2165
    %v2203 = vmul.f32 %v2202, %v2165
    %v2204 = vmul.f32 %v2203, %v2202
    %v2205 = vmul.f32 0.5, %v2204
    %v2206 = vsub.f32 1.5, %v2205
    %v2207 = vmul.f32 %v2202, %v2206
    %v2208 = vmul.f32 %v2165, %v2207
    %vm2209 = vcmp.eq.f32.partialorder %v2165, inf
    %v2210 = vsel %vm2209, %v2165, %v2208
    %vm2211 = vcmp.eq.f32.partialorder %v2165, 0.0
    %v2212 = vand.u32 %v2165, 2147483648
    %v2213 = vsel %vm2211, %v2212, %v2210
    %v2214 = vsub.f32 %v2134, %v2177
    %v2215 = vsub.f32 %v2135, %v2189
    %v2216 = vsub.f32 %v2136, %v2201
    %v2217 = vsub.f32 %v2137, %v2213
    %vm2218 = vcmp.le.f32.partialorder %v2214, %v1385
    %vm2219 = vcmp.le.f32.partialorder %v2215, %v1416
    %vm2220 = vcmp.le.f32.partialorder %v2216, %v1447
    %vm2221 = vcmp.le.f32.partialorder %v2217, %v1478
    %v2222 = vsel %vm2218, 1, 0
    %v2223 = vsel %vm2219, 1, 0
    %v2224 = vsel %vm2220, 1, 0
    %v2225 = vsel %vm2221, 1, 0
    %v2226 = vadd.s32 %v2222, %v2223
    %v2227 = vadd.s32 %v2224, %v2225
    %v2228 = vadd.s32 %v2226, %v2227
    %v2229 = vrot.slane %v2228, 4
    %v2230 = vadd.s32 %v2228, %v2229
    %v2231 = vrot.slane %v2230, 2
    %v2232 = vadd.s32 %v2230, %v2231
    %v2233 = vrot.slane %v2232, 1
    %v2234 = vadd.s32 %v2232, %v2233
    %v2235 = vsub.s32 %v2234, 1
    %vm2236 = vcmp.eq.s32.totalorder %v79, %v2235
    %vm2237 = vcmp.eq.s32.totalorder %v80, %v2235
    %vm2238 = vcmp.eq.s32.totalorder %v81, %v2235
    %vm2239 = vcmp.eq.s32.totalorder %v82, %v2235
    %v2240 = vsel %vm2236, %v2214, 0.0
    %v2241 = vsel %vm2237, %v2215, 0.0
    %v2242 = vsel %vm2238, %v2216, 0.0
    %v2243 = vsel %vm2239, %v2217, 0.0
    %v2244 = vadd.f32 %v2240, %v2241
    %v2245 = vadd.f32 %v2244, %v2242
    %v2246 = vadd.f32 %v2245, %v2243
    %v2247 = vrot.slane %v2246, 4
    %v2248 = vadd.f32 %v2246, %v2247
    %v2249 = vrot.slane %v2248, 2
    %v2250 = vadd.f32 %v2248, %v2249
    %v2251 = vrot.slane %v2250, 1
    %v2252 = vadd.f32 %v2250, %v2251
    %v2253 = vsub.f32 %v42, %v2252
    %v2254 = vsub.f32 %v43, %v2252
    %v2255 = vsub.f32 %v44, %v2252
    %v2256 = vsub.f32 %v45, %v2252
    %v2257 = vmax.f32 %v2253, 0.0
    %v2258 = vmax.f32 %v2254, 0.0
    %v2259 = vmax.f32 %v2255, 0.0
    %v2260 = vmax.f32 %v2256, 0.0
    %v2261 = vmul.f32 %v2257, %v2257
    %v2262 = vmul.f32 %v2258, %v2258
    %v2263 = vmul.f32 %v2259, %v2259
    %v2264 = vmul.f32 %v2260, %v2260
    %v2265 = vlog2.pop %v2261
    %v2266 = vmul.f32 %v2265, 0.6931472
    %v2267 = vlog2.pop %v2262
    %v2268 = vmul.f32 %v2267, 0.6931472
    %v2269 = vlog2.pop %v2263
    %v2270 = vmul.f32 %v2269, 0.6931472
    %v2271 = vlog2.pop %v2264
    %v2272 = vmul.f32 %v2271, 0.6931472
    %2273 = vst [vmem:[#allocation5] sm:$0xff] %v2266
    %2274 = vst [vmem:[#allocation5 + $0x8] sm:$0xff] %v2268
    %2275 = vst [vmem:[#allocation5 + $0x10] sm:$0xff] %v2270
    %2276 = vst [vmem:[#allocation5 + $0x18] sm:$0xff] %v2272
    // Predicated region
    $region10: #{tpu_custom_call.1} parent=1 // pred_check
      _
    $region11: #{tpu_custom_call.1} parent=1 // pred_check_branch
      %2278 = sbr.rel (0) target = $region13
    $region12: #{tpu_custom_call.1} parent=1 // pred_region
      %2280 = vsyncadd [#allocation4], 0
      %s2281 = sshll.u32 [#allocation5], 4
      %s2282 = int_to_ptr.vmem [resolvable:$true] %s2281
      %s2283 = sshll.u32 %s1, 4
      %s2284 = int_to_ptr.hbm [resolvable:$true] %s2283
      %2289 = dma.vmem_to_hbm [thread:$0]  %s2282, 512, %s2284, [#allocation4], 128, 128, 8
    $region13: #{tpu_custom_call.1} parent=1 // pred_fallthru
      _
    // Predicated region
    $region14: #{tpu_custom_call.1} parent=1 // pred_check
      _
    $region15: #{tpu_custom_call.1} parent=1 // pred_check_branch
      %2291 = sbr.rel (0) target = $region17
    $region16: #{tpu_custom_call.1} parent=1 // pred_region
      %2293 = dma.done [#allocation4], 512
    $region17: #{tpu_custom_call.1} parent=1 // pred_fallthru
      _
    %2294 = vsyncpa [#allocation3], 1
    %2295 = vsyncpa [#allocation4], 1

</llo_original>
